<compile_context>
chip_gen: v7x
topology: tpu7x:2x2x1
jax: 0.10.0
libtpu: 0.0.40
codegen_flags: <defaults>
</compile_context>

<pallas_src>
import functools

import jax
import jax.numpy as jnp
import numpy as np
from jax import lax
from jax.experimental import pallas as pl
from jax.experimental.pallas import tpu as pltpu

KSIZE = 3       # 3x3 conv, stride 1, padding 1 (typical CNNBlock kwargs in CSPDarknet53)
LANE = 128      # TPU lane width; output channel tiles are multiples of this
EPS = 1e-5


def _cnn_block_kernel(x_ref, w_ref, b_ref, o_ref):
    """One (batch, row-strip, Cout-tile) per grid step.

    x_ref: (1, 1, TH+2, W+2, Cin)  bf16   row strip with 1-pixel halo (pre-padded)
    w_ref: (3, 3, Cin, TC)         bf16   BN-scale-folded conv weights (HWIO)
    b_ref: (1, TC)                 f32    folded BN/conv bias
    o_ref: (1, TH, W, TC)          f32    lane-dense output tile (TC % 128 == 0)
    """
    TH, W, TC = o_ref.shape[1], o_ref.shape[2], o_ref.shape[3]
    Cin = x_ref.shape[4]

    # Load the strip once; the 9 taps below are value slices of it.
    x = x_ref[0, 0]                                   # (TH+2, W+2, Cin) bf16

    # Conv as 9 shifted 2-D matmuls on the MXU, f32 accumulation.
    acc = jnp.zeros((TH * W, TC), jnp.float32)
    for kh in range(KSIZE):
        for kw in range(KSIZE):
            xs = x[kh:kh + TH, kw:kw + W, :].reshape(TH * W, Cin)   # (TH*W, Cin)
            wk = w_ref[kh, kw]                                      # (Cin, TC)
            acc = acc + jnp.dot(xs, wk, preferred_element_type=jnp.float32)

    # Fused (folded-BN) bias + Swish epilogue.  Sigmoid lowers to the EUP.
    y = acc + b_ref[0, :]
    y = y * jax.nn.sigmoid(y)
    o_ref[...] = y.reshape(1, TH, W, TC).astype(o_ref.dtype)


def _largest_divisor_not_exceeding(n, cap):
    d = max(1, min(cap, n))
    while n % d:
        d -= 1
    return d


@functools.partial(jax.jit, static_argnames=("block_h",))
def cnn_block_forward(x_nchw, w_oihw, conv_b, gamma, beta, run_mean, run_var,
                      *, block_h=8):
    """Conv2d(3x3, s=1, p=1, bias=True) -> BatchNorm2d(eval) -> Swish.  NCHW in/out."""
    N, Cin, H, W = x_nchw.shape
    Cout = w_oihw.shape[0]

    # ---- Fold BN into the conv:  bn(conv(x)+b) = conv_{w*scale}(x) + (scale*(b-mean)+beta)
    scale = gamma / jnp.sqrt(run_var + EPS)                       # (Cout,)
    bias = scale * (conv_b - run_mean) + beta                     # (Cout,)

    w_hwio = jnp.transpose(w_oihw, (2, 3, 1, 0)) * scale[None, None, None, :]

    # ---- Lane-dense output channels: pad Cout up to a multiple of 128.
    cout_p = ((Cout + LANE - 1) // LANE) * LANE
    pad_c = cout_p - Cout
    w_hwio = jnp.pad(w_hwio, ((0, 0), (0, 0), (0, 0), (0, pad_c))).astype(jnp.bfloat16)
    bias_p = jnp.pad(bias, (0, pad_c)).reshape(1, cout_p).astype(jnp.float32)

    # ---- bf16 activations, NHWC, zero-padded spatially (padding=1).
    x_nhwc = jnp.transpose(x_nchw, (0, 2, 3, 1)).astype(jnp.bfloat16)
    x_pad = jnp.pad(x_nhwc, ((0, 0), (1, 1), (1, 1), (0, 0)))     # (N, H+2, W+2, Cin)

    # ---- Row-strip tiling with a 1-row halo on each side.
    TH = _largest_divisor_not_exceeding(H, block_h)
    S = H // TH
    strips = jnp.stack([x_pad[:, s * TH: s * TH + TH + 2] for s in range(S)], axis=1)
    # strips: (N, S, TH+2, W+2, Cin)

    TC = LANE                                                      # Cout tile (multiple of 128)
    n_cblk = cout_p // TC

    out_nhwc = pl.pallas_call(
        _cnn_block_kernel,
        out_shape=jax.ShapeDtypeStruct((N, H, W, cout_p), jnp.float32),
        grid_spec=pltpu.PrefetchScalarGridSpec(
            num_scalar_prefetch=0,
            grid=(N, S, n_cblk),
            in_specs=[
                pl.BlockSpec((1, 1, TH + 2, W + 2, Cin),
                             lambda n, s, c: (n, s, 0, 0, 0)),
                pl.BlockSpec((KSIZE, KSIZE, Cin, TC),
                             lambda n, s, c: (0, 0, 0, c)),
                pl.BlockSpec((1, TC), lambda n, s, c: (0, c)),
            ],
            out_specs=pl.BlockSpec((1, TH, W, TC),
                                   lambda n, s, c: (n, s, 0, c)),
        ),
        compiler_params=pltpu.CompilerParams(
            dimension_semantics=("parallel", "parallel", "parallel"),
            # Tiny tiles here; re-derive per layer (<= ~56 MiB on v7x, larger on v5e/v6e).
            vmem_limit_bytes=48 * 1024 * 1024,
        ),
    )(strips, w_hwio, bias_p)

    # Drop padded channels, back to NCHW.
    return jnp.transpose(out_nhwc[..., :Cout], (0, 3, 1, 2))


# --------------------------- references for validation ---------------------------

def _reference_f32(x, w, conv_b, gamma, beta, mean, var):
    """Exact f32 CNNBlock forward (conv + eval-mode BN + Swish)."""
    y = lax.conv_general_dilated(x, w, (1, 1), ((1, 1), (1, 1)),
                                 dimension_numbers=("NCHW", "OIHW", "NCHW"))
    y = y + conv_b[None, :, None, None]
    y = (y - mean[None, :, None, None]) / jnp.sqrt(var[None, :, None, None] + EPS)
    y = y * gamma[None, :, None, None] + beta[None, :, None, None]
    return y * jax.nn.sigmoid(y)


def _reference_bf16_matched(x, w, conv_b, gamma, beta, mean, var):
    """Same math but with the kernel's bf16 input/weight quantization and BN folding."""
    scale = gamma / jnp.sqrt(var + EPS)
    bias = scale * (conv_b - mean) + beta
    xq = x.astype(jnp.bfloat16).astype(jnp.float32)
    wq = (w * scale[:, None, None, None]).astype(jnp.bfloat16).astype(jnp.float32)
    y = lax.conv_general_dilated(xq, wq, (1, 1), ((1, 1), (1, 1)),
                                 dimension_numbers=("NCHW", "OIHW", "NCHW"))
    y = y + bias[None, :, None, None]
    return y * jax.nn.sigmoid(y)


if __name__ == "__main__":
    # Small shapes consistent with the module's forward (NCHW input).
    N, Cin, Cout, H, W = 2, 4, 8, 16, 16

    key = jax.random.PRNGKey(0)
    kx, kw, kb, kg, kbt, km, kv = jax.random.split(key, 7)

    x = jax.random.normal(kx, (N, Cin, H, W), jnp.float32)
    w = jax.random.normal(kw, (Cout, Cin, KSIZE, KSIZE), jnp.float32) * 0.1
    conv_b = jax.random.normal(kb, (Cout,), jnp.float32) * 0.1
    gamma = 1.0 + 0.1 * jax.random.normal(kg, (Cout,), jnp.float32)
    beta = 0.1 * jax.random.normal(kbt, (Cout,), jnp.float32)
    run_mean = 0.1 * jax.random.normal(km, (Cout,), jnp.float32)
    run_var = jnp.abs(jax.random.normal(kv, (Cout,), jnp.float32)) + 0.5

    out = cnn_block_forward(x, w, conv_b, gamma, beta, run_mean, run_var)
    jax.block_until_ready(out)

    # Tight check against a reference with the same bf16 input/weight quantization.
    ref_q = _reference_bf16_matched(x, w, conv_b, gamma, beta, run_mean, run_var)
    np.testing.assert_allclose(np.asarray(out), np.asarray(ref_q), atol=2e-3, rtol=2e-3)

    # Loose check against the exact f32 module (bf16 quantization is the only deviation).
    ref = _reference_f32(x, w, conv_b, gamma, beta, run_mean, run_var)
    np.testing.assert_allclose(np.asarray(out), np.asarray(ref), atol=1e-1, rtol=1e-1)

    print("KERNEL_OK")
</pallas_src>

<mosaic_0001>
module attributes {stable_mosaic.version = 11 : i64} {
  func.func @_cnn_block_kernel(%arg0: i32, %arg1: i32, %arg2: i32, %arg3: memref<1x1x10x18x4xbf16, #tpu.memory_space<vmem>>, %arg4: memref<3x3x4x128xbf16, #tpu.memory_space<vmem>>, %arg5: memref<1x128xf32, #tpu.memory_space<vmem>>, %arg6: memref<1x8x16x128xf32, #tpu.memory_space<vmem>>) attributes {dimension_semantics = [#tpu.dimension_semantics<parallel>, #tpu.dimension_semantics<parallel>, #tpu.dimension_semantics<parallel>], iteration_bounds = array<i64: 2, 2, 1>, scalar_prefetch = 0 : i64, scratch_operands = 0 : i64, tpu.core_type = #tpu.core_type<tc>, window_params = [{transform_indices = @transform_0, window_bounds = array<i64: 1, 1, 10, 18, 4>}, {transform_indices = @transform_1, window_bounds = array<i64: 3, 3, 4, 128>}, {transform_indices = @transform_2, window_bounds = array<i64: 1, 128>}, {transform_indices = @transform_3, window_bounds = array<i64: 1, 8, 16, 128>}]} {
    %c0 = arith.constant 0 : index
    %c0_0 = arith.constant 0 : index
    %c0_1 = arith.constant 0 : index
    %c0_2 = arith.constant 0 : index
    %c0_3 = arith.constant 0 : index
    %0 = vector.load %arg3[%c0, %c0_0, %c0_1, %c0_2, %c0_3] : memref<1x1x10x18x4xbf16, #tpu.memory_space<vmem>>, vector<1x1x10x18x4xbf16>
    %1 = vector.shape_cast %0 : vector<1x1x10x18x4xbf16> to vector<10x18x4xbf16>
    %cst = arith.constant 0.000000e+00 : f32
    %2 = vector.broadcast %cst : f32 to vector<128x128xf32>
    %3 = vector.extract_strided_slice %1 {offsets = [0, 0, 0], sizes = [8, 16, 4], strides = [1, 1, 1]} : vector<10x18x4xbf16> to vector<8x16x4xbf16>
    %4 = vector.shape_cast %3 : vector<8x16x4xbf16> to vector<128x4xbf16>
    %c0_4 = arith.constant 0 : index
    %c0_5 = arith.constant 0 : index
    %c0_6 = arith.constant 0 : index
    %c0_7 = arith.constant 0 : index
    %5 = vector.load %arg4[%c0_4, %c0_5, %c0_6, %c0_7] : memref<3x3x4x128xbf16, #tpu.memory_space<vmem>>, vector<1x1x4x128xbf16>
    %6 = vector.shape_cast %5 : vector<1x1x4x128xbf16> to vector<4x128xbf16>
    %cst_8 = arith.constant dense<0.000000e+00> : vector<128x128xf32>
    %7 = tpu.matmul %4, %6, %cst_8 {dimension_numbers = #tpu.dot_dimension_numbers<[1], [0], [0], [1], [0, 0, 1, 1], [], []>} : vector<128x4xbf16>, vector<4x128xbf16>, vector<128x128xf32> -> vector<128x128xf32>
    %8 = arith.addf %2, %7 : vector<128x128xf32>
    %9 = vector.extract_strided_slice %1 {offsets = [0, 1, 0], sizes = [8, 16, 4], strides = [1, 1, 1]} : vector<10x18x4xbf16> to vector<8x16x4xbf16>
    %10 = vector.shape_cast %9 : vector<8x16x4xbf16> to vector<128x4xbf16>
    %c0_9 = arith.constant 0 : index
    %c1 = arith.constant 1 : index
    %c0_10 = arith.constant 0 : index
    %c0_11 = arith.constant 0 : index
    %11 = vector.load %arg4[%c0_9, %c1, %c0_10, %c0_11] : memref<3x3x4x128xbf16, #tpu.memory_space<vmem>>, vector<1x1x4x128xbf16>
    %12 = vector.shape_cast %11 : vector<1x1x4x128xbf16> to vector<4x128xbf16>
    %cst_12 = arith.constant dense<0.000000e+00> : vector<128x128xf32>
    %13 = tpu.matmul %10, %12, %cst_12 {dimension_numbers = #tpu.dot_dimension_numbers<[1], [0], [0], [1], [0, 0, 1, 1], [], []>} : vector<128x4xbf16>, vector<4x128xbf16>, vector<128x128xf32> -> vector<128x128xf32>
    %14 = arith.addf %8, %13 : vector<128x128xf32>
    %15 = vector.extract_strided_slice %1 {offsets = [0, 2, 0], sizes = [8, 16, 4], strides = [1, 1, 1]} : vector<10x18x4xbf16> to vector<8x16x4xbf16>
    %16 = vector.shape_cast %15 : vector<8x16x4xbf16> to vector<128x4xbf16>
    %c0_13 = arith.constant 0 : index
    %c2 = arith.constant 2 : index
    %c0_14 = arith.constant 0 : index
    %c0_15 = arith.constant 0 : index
    %17 = vector.load %arg4[%c0_13, %c2, %c0_14, %c0_15] : memref<3x3x4x128xbf16, #tpu.memory_space<vmem>>, vector<1x1x4x128xbf16>
    %18 = vector.shape_cast %17 : vector<1x1x4x128xbf16> to vector<4x128xbf16>
    %cst_16 = arith.constant dense<0.000000e+00> : vector<128x128xf32>
    %19 = tpu.matmul %16, %18, %cst_16 {dimension_numbers = #tpu.dot_dimension_numbers<[1], [0], [0], [1], [0, 0, 1, 1], [], []>} : vector<128x4xbf16>, vector<4x128xbf16>, vector<128x128xf32> -> vector<128x128xf32>
    %20 = arith.addf %14, %19 : vector<128x128xf32>
    %21 = vector.extract_strided_slice %1 {offsets = [1, 0, 0], sizes = [8, 16, 4], strides = [1, 1, 1]} : vector<10x18x4xbf16> to vector<8x16x4xbf16>
    %22 = vector.shape_cast %21 : vector<8x16x4xbf16> to vector<128x4xbf16>
    %c1_17 = arith.constant 1 : index
    %c0_18 = arith.constant 0 : index
    %c0_19 = arith.constant 0 : index
    %c0_20 = arith.constant 0 : index
    %23 = vector.load %arg4[%c1_17, %c0_18, %c0_19, %c0_20] : memref<3x3x4x128xbf16, #tpu.memory_space<vmem>>, vector<1x1x4x128xbf16>
    %24 = vector.shape_cast %23 : vector<1x1x4x128xbf16> to vector<4x128xbf16>
    %cst_21 = arith.constant dense<0.000000e+00> : vector<128x128xf32>
    %25 = tpu.matmul %22, %24, %cst_21 {dimension_numbers = #tpu.dot_dimension_numbers<[1], [0], [0], [1], [0, 0, 1, 1], [], []>} : vector<128x4xbf16>, vector<4x128xbf16>, vector<128x128xf32> -> vector<128x128xf32>
    %26 = arith.addf %20, %25 : vector<128x128xf32>
    %27 = vector.extract_strided_slice %1 {offsets = [1, 1, 0], sizes = [8, 16, 4], strides = [1, 1, 1]} : vector<10x18x4xbf16> to vector<8x16x4xbf16>
    %28 = vector.shape_cast %27 : vector<8x16x4xbf16> to vector<128x4xbf16>
    %c1_22 = arith.constant 1 : index
    %c1_23 = arith.constant 1 : index
    %c0_24 = arith.constant 0 : index
    %c0_25 = arith.constant 0 : index
    %29 = vector.load %arg4[%c1_22, %c1_23, %c0_24, %c0_25] : memref<3x3x4x128xbf16, #tpu.memory_space<vmem>>, vector<1x1x4x128xbf16>
    %30 = vector.shape_cast %29 : vector<1x1x4x128xbf16> to vector<4x128xbf16>
    %cst_26 = arith.constant dense<0.000000e+00> : vector<128x128xf32>
    %31 = tpu.matmul %28, %30, %cst_26 {dimension_numbers = #tpu.dot_dimension_numbers<[1], [0], [0], [1], [0, 0, 1, 1], [], []>} : vector<128x4xbf16>, vector<4x128xbf16>, vector<128x128xf32> -> vector<128x128xf32>
    %32 = arith.addf %26, %31 : vector<128x128xf32>
    %33 = vector.extract_strided_slice %1 {offsets = [1, 2, 0], sizes = [8, 16, 4], strides = [1, 1, 1]} : vector<10x18x4xbf16> to vector<8x16x4xbf16>
    %34 = vector.shape_cast %33 : vector<8x16x4xbf16> to vector<128x4xbf16>
    %c1_27 = arith.constant 1 : index
    %c2_28 = arith.constant 2 : index
    %c0_29 = arith.constant 0 : index
    %c0_30 = arith.constant 0 : index
    %35 = vector.load %arg4[%c1_27, %c2_28, %c0_29, %c0_30] : memref<3x3x4x128xbf16, #tpu.memory_space<vmem>>, vector<1x1x4x128xbf16>
    %36 = vector.shape_cast %35 : vector<1x1x4x128xbf16> to vector<4x128xbf16>
    %cst_31 = arith.constant dense<0.000000e+00> : vector<128x128xf32>
    %37 = tpu.matmul %34, %36, %cst_31 {dimension_numbers = #tpu.dot_dimension_numbers<[1], [0], [0], [1], [0, 0, 1, 1], [], []>} : vector<128x4xbf16>, vector<4x128xbf16>, vector<128x128xf32> -> vector<128x128xf32>
    %38 = arith.addf %32, %37 : vector<128x128xf32>
    %39 = vector.extract_strided_slice %1 {offsets = [2, 0, 0], sizes = [8, 16, 4], strides = [1, 1, 1]} : vector<10x18x4xbf16> to vector<8x16x4xbf16>
    %40 = vector.shape_cast %39 : vector<8x16x4xbf16> to vector<128x4xbf16>
    %c2_32 = arith.constant 2 : index
    %c0_33 = arith.constant 0 : index
    %c0_34 = arith.constant 0 : index
    %c0_35 = arith.constant 0 : index
    %41 = vector.load %arg4[%c2_32, %c0_33, %c0_34, %c0_35] : memref<3x3x4x128xbf16, #tpu.memory_space<vmem>>, vector<1x1x4x128xbf16>
    %42 = vector.shape_cast %41 : vector<1x1x4x128xbf16> to vector<4x128xbf16>
    %cst_36 = arith.constant dense<0.000000e+00> : vector<128x128xf32>
    %43 = tpu.matmul %40, %42, %cst_36 {dimension_numbers = #tpu.dot_dimension_numbers<[1], [0], [0], [1], [0, 0, 1, 1], [], []>} : vector<128x4xbf16>, vector<4x128xbf16>, vector<128x128xf32> -> vector<128x128xf32>
    %44 = arith.addf %38, %43 : vector<128x128xf32>
    %45 = vector.extract_strided_slice %1 {offsets = [2, 1, 0], sizes = [8, 16, 4], strides = [1, 1, 1]} : vector<10x18x4xbf16> to vector<8x16x4xbf16>
    %46 = vector.shape_cast %45 : vector<8x16x4xbf16> to vector<128x4xbf16>
    %c2_37 = arith.constant 2 : index
    %c1_38 = arith.constant 1 : index
    %c0_39 = arith.constant 0 : index
    %c0_40 = arith.constant 0 : index
    %47 = vector.load %arg4[%c2_37, %c1_38, %c0_39, %c0_40] : memref<3x3x4x128xbf16, #tpu.memory_space<vmem>>, vector<1x1x4x128xbf16>
    %48 = vector.shape_cast %47 : vector<1x1x4x128xbf16> to vector<4x128xbf16>
    %cst_41 = arith.constant dense<0.000000e+00> : vector<128x128xf32>
    %49 = tpu.matmul %46, %48, %cst_41 {dimension_numbers = #tpu.dot_dimension_numbers<[1], [0], [0], [1], [0, 0, 1, 1], [], []>} : vector<128x4xbf16>, vector<4x128xbf16>, vector<128x128xf32> -> vector<128x128xf32>
    %50 = arith.addf %44, %49 : vector<128x128xf32>
    %51 = vector.extract_strided_slice %1 {offsets = [2, 2, 0], sizes = [8, 16, 4], strides = [1, 1, 1]} : vector<10x18x4xbf16> to vector<8x16x4xbf16>
    %52 = vector.shape_cast %51 : vector<8x16x4xbf16> to vector<128x4xbf16>
    %c2_42 = arith.constant 2 : index
    %c2_43 = arith.constant 2 : index
    %c0_44 = arith.constant 0 : index
    %c0_45 = arith.constant 0 : index
    %53 = vector.load %arg4[%c2_42, %c2_43, %c0_44, %c0_45] : memref<3x3x4x128xbf16, #tpu.memory_space<vmem>>, vector<1x1x4x128xbf16>
    %54 = vector.shape_cast %53 : vector<1x1x4x128xbf16> to vector<4x128xbf16>
    %cst_46 = arith.constant dense<0.000000e+00> : vector<128x128xf32>
    %55 = tpu.matmul %52, %54, %cst_46 {dimension_numbers = #tpu.dot_dimension_numbers<[1], [0], [0], [1], [0, 0, 1, 1], [], []>} : vector<128x4xbf16>, vector<4x128xbf16>, vector<128x128xf32> -> vector<128x128xf32>
    %56 = arith.addf %50, %55 : vector<128x128xf32>
    %c0_47 = arith.constant 0 : index
    %c0_48 = arith.constant 0 : index
    %57 = vector.load %arg5[%c0_47, %c0_48] : memref<1x128xf32, #tpu.memory_space<vmem>>, vector<1x128xf32>
    %58 = vector.shape_cast %57 : vector<1x128xf32> to vector<128xf32>
    %59 = vector.shape_cast %58 : vector<128xf32> to vector<1x128xf32>
    %60 = vector.broadcast %59 : vector<1x128xf32> to vector<128x128xf32>
    %61 = arith.addf %56, %60 : vector<128x128xf32>
    %62 = arith.negf %61 : vector<128x128xf32>
    %63 = math.exp %62 : vector<128x128xf32>
    %cst_49 = arith.constant 1.000000e+00 : f32
    %64 = vector.broadcast %cst_49 : f32 to vector<128x128xf32>
    %65 = arith.addf %64, %63 : vector<128x128xf32>
    %66 = arith.divf %64, %65 : vector<128x128xf32>
    %67 = arith.mulf %61, %66 : vector<128x128xf32>
    %68 = vector.shape_cast %67 : vector<128x128xf32> to vector<1x8x16x128xf32>
    %c0_50 = arith.constant 0 : index
    %c0_51 = arith.constant 0 : index
    %c0_52 = arith.constant 0 : index
    %c0_53 = arith.constant 0 : index
    %69 = vector.load %arg6[%c0_50, %c0_51, %c0_52, %c0_53] : memref<1x8x16x128xf32, #tpu.memory_space<vmem>>, vector<1x8x16x128xf32>
    tpu.vector_store %arg6[%c0_50, %c0_51, %c0_52, %c0_53], %68 {strides = array<i32>} : memref<1x8x16x128xf32, #tpu.memory_space<vmem>>, vector<1x8x16x128xf32>,
    return
  }
  func.func @transform_0(%arg0: i32, %arg1: i32, %arg2: i32) -> (i32, i32, i32, i32, i32) {
    %c0_i32 = arith.constant 0 : i32
    %c0_i32_0 = arith.constant 0 : i32
    %c0_i32_1 = arith.constant 0 : i32
    %c0_i32_2 = arith.constant 0 : i32
    return %arg0, %arg1, %c0_i32, %c0_i32_0, %c0_i32_1 : i32, i32, i32, i32, i32
  }
  func.func @transform_1(%arg0: i32, %arg1: i32, %arg2: i32) -> (i32, i32, i32, i32) {
    %c0_i32 = arith.constant 0 : i32
    %c0_i32_0 = arith.constant 0 : i32
    %c0_i32_1 = arith.constant 0 : i32
    %c0_i32_2 = arith.constant 0 : i32
    return %c0_i32, %c0_i32_0, %c0_i32_1, %arg2 : i32, i32, i32, i32
  }
  func.func @transform_2(%arg0: i32, %arg1: i32, %arg2: i32) -> (i32, i32) {
    %c0_i32 = arith.constant 0 : i32
    %c0_i32_0 = arith.constant 0 : i32
    return %c0_i32, %arg2 : i32, i32
  }
  func.func @transform_3(%arg0: i32, %arg1: i32, %arg2: i32) -> (i32, i32, i32, i32) {
    %c0_i32 = arith.constant 0 : i32
    %c0_i32_0 = arith.constant 0 : i32
    return %arg0, %arg1, %c0_i32, %arg2 : i32, i32, i32, i32
  }
}

</mosaic_0001>

<llo_original>
// kernel: cnn_block_forward.1
$region0: #{cnn_block_forward.1}
  #allocation0 [shape = 'u32[]', space=smem, size = 0x4, offset = 0x4, fixed_abs, tag = 'smem constant byte address 0x4 - core index']
  #allocation1 [shape = 'u32[144,128]{1,0:T(1,128)}', space=vmem, size = 0x12000, scoped, tag = 'internal scratch']
  %s0 = inlined_call_operand.vmem [shape: bf16[2,2,10,18,4], index: 0, kind: input, shape index: {}]
  %s1 = inlined_call_operand.vmem [shape: bf16[3,3,4,128], index: 1, kind: input, shape index: {}]
  %s2 = inlined_call_operand.vmem [shape: f32[1,128], index: 2, kind: input, shape index: {}]
  %s3 = inlined_call_operand.vmem [shape: f32[2,16,16,128], index: 3, kind: output, shape index: {}]
  %s4 = sld [smem:[#allocation0]]
  $region45: #{cnn_block_forward.1} parent=0
    _
  %s6 = ssub.s32 1, %s4
  %s7 = scalar_select 0, %s6, %s4
  loop: start=0, step=1, limit=6
  $region2: #{cnn_block_forward.1} parent=0 // loop_pre_header
    _
  $region3: #{cnn_block_forward.1} parent=0 // loop_header
    %s9 = sphi 0, %s13
    %p10 = scmp.ge.s32.totalorder %s9, 6
    %s16 = sphi 0, %s35
    %s17 = sphi 0, %s31
    %s18 = sphi 0, %s27
    %s19 = sphi 0, %s16
    %s20 = sphi 0, %s17
    %s21 = sphi 0, %s18
    %s22 = sphi 0, %s19
    %s23 = sphi 0, %s20
    %s24 = sphi 0, %s21
    %s40 = sphi 0, %s42
    %s43 = sphi 0, %s40
    %s44 = sphi 0, %s43
    %s60 = sphi 0, %s44
    %s66 = sphi 0, %s68
    %s69 = sphi 0, %s66
    %s70 = sphi 0, %s69
    %s86 = sphi 0, %s70
    %s92 = sphi 0, %s94
    %s95 = sphi 0, %s92
    %s96 = sphi 0, %s95
    %s112 = sphi 0, %s96
    %s122 = sphi 0, %s124
    %s125 = sphi 0, %s122
    %s126 = sphi 0, %s125
    %s142 = sphi 0, %s126
  $region4: #{cnn_block_forward.1} parent=0 // loop_header_branch
    %12 = sbr.rel (%p10) target = $region8
  $region5: #{cnn_block_forward.1} parent=0 // loop_body
    %s14 = ssub.s32 %s9, 1
    %s15 = ssub.s32 %s9, 2
    %s25 = sadd.s32 1, %s18
    %p26 = scmp.ge.s32.totalorder %s25, 1
    %s27 = scalar_select %p26, 0, %s25
    %s28 = sadd.s32 1, %s17
    %s29 = scalar_select %p26, %s28, %s17
    %p30 = scmp.ge.s32.totalorder %s29, 2
    %s31 = scalar_select %p30, 0, %s29
    %s32 = sadd.s32 1, %s16
    %s33 = scalar_select %p30, %s32, %s16
    %p34 = scmp.ge.s32.totalorder %s33, 2
    %s35 = scalar_select %p34, 0, %s33
    %s36 = ssub.s32 %s16, %s35
    %s37 = ssub.s32 %s17, %s31
    %s38 = sor.u32 %s36, %s37
    %p39 = scmp.eq.s32.totalorder %s38, 0
    %s41 = sadd.s32 %s40, 1
    %s42 = scalar_select %p39, %s40, %s41
    %p45 = pneg %p39
    %p46 = scmp.eq.s32.totalorder %s9, 3
    %p47 = por %p45, %p46
    %p48 = scmp.ne.s32.totalorder %s40, %s43
    %p49 = scmp.eq.s32.totalorder %s9, 0
    %p50 = por %p48, %p49
    %p51 = scmp.ne.s32.totalorder %s40, %s43
    %p52 = scmp.eq.s32.totalorder %s14, 3
    %p53 = por %p51, %p52
    %p54 = scmp.ne.s32.totalorder %s43, %s44
    %p55 = scmp.eq.s32.totalorder %s14, 0
    %p56 = por %p54, %p55
    %p57 = scmp.ne.s32.totalorder %s43, %s44
    %p58 = scmp.eq.s32.totalorder %s15, 3
    %p59 = por %p57, %p58
    %p61 = scmp.ne.s32.totalorder %s44, %s60
    %p62 = scmp.eq.s32.totalorder %s15, 0
    %p63 = por %p61, %p62
    %s64 = ssub.s32 %s18, %s27
    %p65 = scmp.eq.s32.totalorder %s64, 0
    %s67 = sadd.s32 %s66, 1
    %s68 = scalar_select %p65, %s66, %s67
    %p71 = pneg %p65
    %p72 = scmp.eq.s32.totalorder %s9, 3
    %p73 = por %p71, %p72
    %p74 = scmp.ne.s32.totalorder %s66, %s69
    %p75 = scmp.eq.s32.totalorder %s9, 0
    %p76 = por %p74, %p75
    %p77 = scmp.ne.s32.totalorder %s66, %s69
    %p78 = scmp.eq.s32.totalorder %s14, 3
    %p79 = por %p77, %p78
    %p80 = scmp.ne.s32.totalorder %s69, %s70
    %p81 = scmp.eq.s32.totalorder %s14, 0
    %p82 = por %p80, %p81
    %p83 = scmp.ne.s32.totalorder %s69, %s70
    %p84 = scmp.eq.s32.totalorder %s15, 3
    %p85 = por %p83, %p84
    %p87 = scmp.ne.s32.totalorder %s70, %s86
    %p88 = scmp.eq.s32.totalorder %s15, 0
    %p89 = por %p87, %p88
    %s90 = ssub.s32 %s18, %s27
    %p91 = scmp.eq.s32.totalorder %s90, 0
    %s93 = sadd.s32 %s92, 1
    %s94 = scalar_select %p91, %s92, %s93
    %p97 = pneg %p91
    %p98 = scmp.eq.s32.totalorder %s9, 3
    %p99 = por %p97, %p98
    %p100 = scmp.ne.s32.totalorder %s92, %s95
    %p101 = scmp.eq.s32.totalorder %s9, 0
    %p102 = por %p100, %p101
    %p103 = scmp.ne.s32.totalorder %s92, %s95
    %p104 = scmp.eq.s32.totalorder %s14, 3
    %p105 = por %p103, %p104
    %p106 = scmp.ne.s32.totalorder %s95, %s96
    %p107 = scmp.eq.s32.totalorder %s14, 0
    %p108 = por %p106, %p107
    %p109 = scmp.ne.s32.totalorder %s95, %s96
    %p110 = scmp.eq.s32.totalorder %s15, 3
    %p111 = por %p109, %p110
    %p113 = scmp.ne.s32.totalorder %s96, %s112
    %p114 = scmp.eq.s32.totalorder %s15, 0
    %p115 = por %p113, %p114
    %s116 = ssub.s32 %s16, %s35
    %s117 = ssub.s32 %s17, %s31
    %s118 = sor.u32 %s116, %s117
    %s119 = ssub.s32 %s18, %s27
    %s120 = sor.u32 %s118, %s119
    %p121 = scmp.eq.s32.totalorder %s120, 0
    %s123 = sadd.s32 %s122, 1
    %s124 = scalar_select %p121, %s122, %s123
    %p127 = pneg %p121
    %p128 = scmp.eq.s32.totalorder %s9, 3
    %p129 = por %p127, %p128
    %p130 = scmp.ne.s32.totalorder %s122, %s125
    %p131 = scmp.eq.s32.totalorder %s9, 0
    %p132 = por %p130, %p131
    %p133 = scmp.ne.s32.totalorder %s122, %s125
    %p134 = scmp.eq.s32.totalorder %s14, 3
    %p135 = por %p133, %p134
    %p136 = scmp.ne.s32.totalorder %s125, %s126
    %p137 = scmp.eq.s32.totalorder %s14, 0
    %p138 = por %p136, %p137
    %p139 = scmp.ne.s32.totalorder %s125, %s126
    %p140 = scmp.eq.s32.totalorder %s15, 3
    %p141 = por %p139, %p140
    %p143 = scmp.ne.s32.totalorder %s126, %s142
    %p144 = scmp.eq.s32.totalorder %s15, 0
    %p145 = por %p143, %p144
    %p146 = scmp.le.s32.totalorder 1, %s9
    %p147 = scmp.lt.s32.totalorder %s9, 5
    %p148 = pnand %p146, %p147
    %p149 = pneg %p148
    // Predicated region
    $region9: #{cnn_block_forward.1} parent=5 // pred_check
      _
    $region10: #{cnn_block_forward.1} parent=5 // pred_check_branch
      %151 = sbr.rel (%p148) target = $region12
    $region11: #{cnn_block_forward.1} parent=5 // pred_region
      %s152 = ssub.s32 %s9, 1
      // Predicated region
      $region13: #{cnn_block_forward.1} parent=11 // pred_check
        %p153 = pneg %p82
      $region14: #{cnn_block_forward.1} parent=11 // pred_check_branch
        %155 = sbr.rel (%p153) target = $region16
      $region15: #{cnn_block_forward.1} parent=11 // pred_region
        %p156 = scmp.lt.s32.totalorder %s21, 0
        %s157 = scalar_select %p156, %s21, 0
        %s158 = smul.addr %s157, 2
        %s159 = scalar_lea.vmem %s1, %s158
      $region16: #{cnn_block_forward.1} parent=11 // pred_fallthru
        _
      // Predicated region
      $region17: #{cnn_block_forward.1} parent=11 // pred_check
        %p160 = pneg %p108
      $region18: #{cnn_block_forward.1} parent=11 // pred_check_branch
        %162 = sbr.rel (%p160) target = $region20
      $region19: #{cnn_block_forward.1} parent=11 // pred_region
        %p163 = scmp.lt.s32.totalorder %s21, 0
        %s164 = scalar_select %p163, %s21, 0
        %s165 = scalar_lea.vmem %s2, %s164
      $region20: #{cnn_block_forward.1} parent=11 // pred_fallthru
        _
    $region12: #{cnn_block_forward.1} parent=5 // pred_fallthru
      _
    %p166 = scmp.lt.s32.totalorder %s9, 4
    // Predicated region
    $region21: #{cnn_block_forward.1} parent=5 // pred_check
      %p167 = pneg %p166
    $region22: #{cnn_block_forward.1} parent=5 // pred_check_branch
      %169 = sbr.rel (%p167) target = $region24
    $region23: #{cnn_block_forward.1} parent=5 // pred_region
      // Predicated region
      $region25: #{cnn_block_forward.1} parent=23 // pred_check
        %p170 = pneg %p50
      $region26: #{cnn_block_forward.1} parent=23 // pred_check_branch
        %172 = sbr.rel (%p170) target = $region28
      $region27: #{cnn_block_forward.1} parent=23 // pred_region
        %p173 = scmp.lt.s32.totalorder %s16, 1
        %s174 = scalar_select %p173, %s16, 1
        %p175 = scmp.lt.s32.totalorder %s17, 1
        %s176 = scalar_select %p175, %s17, 1
        %s177 = smul.addr %s176, 30
        %s178 = smul.addr %s174, 60
        %s179 = sadd.s32 %s177, %s178
        %s180 = smul.addr %s179, 4
        %s181 = scalar_lea.vmem %s0, %s180
      $region28: #{cnn_block_forward.1} parent=23 // pred_fallthru
        _
    $region24: #{cnn_block_forward.1} parent=5 // pred_fallthru
      _
    %p182 = scmp.le.s32.totalorder 1, %s9
    %p183 = scmp.lt.s32.totalorder %s9, 5
    %p184 = pnand %p182, %p183
    %p185 = pneg %p184
    // Predicated region
    $region29: #{cnn_block_forward.1} parent=5 // pred_check
      _
    $region30: #{cnn_block_forward.1} parent=5 // pred_check_branch
      %187 = sbr.rel (%p184) target = $region32
    $region31: #{cnn_block_forward.1} parent=5 // pred_region
      %s188 = ssub.s32 %s9, 1
      %p189 = scmp.lt.s32.totalorder %s19, 1
      %s190 = scalar_select %p189, %s19, 1
      %p191 = scmp.lt.s32.totalorder %s20, 1
      %s192 = scalar_select %p191, %s20, 1
      %s193 = smul.addr %s192, 30
      %s194 = smul.addr %s190, 60
      %s195 = sadd.s32 %s193, %s194
      %s196 = smul.addr %s195, 4
      %s197 = scalar_lea.vmem %s0, %s196
      %p198 = pneg %p56
      %p199 = pneg %p53
      %p200 = scmp.lt.s32.totalorder %s21, 0
      %s201 = scalar_select %p200, %s21, 0
      %s202 = smul.addr %s201, 2
      %s203 = scalar_lea.vmem %s1, %s202
      %p204 = pneg %p82
      %p205 = pneg %p79
      %p206 = scmp.lt.s32.totalorder %s21, 0
      %s207 = scalar_select %p206, %s21, 0
      %s208 = scalar_lea.vmem %s2, %s207
      %p209 = pneg %p108
      %p210 = pneg %p105
      %p211 = pneg %p138
      %p212 = pneg %p135
      %s213 = smul.u32 8, %s20
      %p214 = scmp.lt.s32.totalorder %s19, 1
      %s215 = scalar_select %p214, %s19, 1
      %p216 = scmp.lt.s32.totalorder %s213, 15
      %s217 = scalar_select %p216, %s213, 15
      %p218 = scmp.lt.s32.totalorder %s21, 0
      %s219 = scalar_select %p218, %s21, 0
      %s220 = smul.addr %s217, 2
      %s221 = sadd.s32 %s219, %s220
      %s222 = smul.addr %s215, 32
      %s223 = sadd.s32 %s221, %s222
      %s224 = smul.addr %s223, 8
      %s225 = scalar_lea.vmem %s3, %s224
      %p226 = scmp.lt.s32.totalorder %s19, 1
      %s227 = scalar_select %p226, %s19, 1
      %p228 = scmp.lt.s32.totalorder %s20, 1
      %s229 = scalar_select %p228, %s20, 1
      %s230 = smul.addr %s229, 30
      %s231 = smul.addr %s227, 60
      %s232 = sadd.s32 %s230, %s231
      %s233 = smul.addr %s232, 4
      %s234 = scalar_lea.vmem %s0, %s233
      %p235 = scmp.lt.s32.totalorder %s21, 0
      %s236 = scalar_select %p235, %s21, 0
      %s237 = smul.addr %s236, 2
      %s238 = scalar_lea.vmem %s1, %s237
      %p239 = scmp.lt.s32.totalorder %s21, 0
      %s240 = scalar_select %p239, %s21, 0
      %s241 = scalar_lea.vmem %s2, %s240
      %s242 = smul.u32 8, %s20
      %p243 = scmp.lt.s32.totalorder %s19, 1
      %s244 = scalar_select %p243, %s19, 1
      %p245 = scmp.lt.s32.totalorder %s242, 15
      %s246 = scalar_select %p245, %s242, 15
      %p247 = scmp.lt.s32.totalorder %s21, 0
      %s248 = scalar_select %p247, %s21, 0
      %s249 = smul.addr %s246, 2
      %s250 = sadd.s32 %s248, %s249
      %s251 = smul.addr %s244, 32
      %s252 = sadd.s32 %s250, %s251
      %s253 = smul.addr %s252, 8
      %s254 = scalar_lea.vmem %s3, %s253
      %s255 = smul.u32 8, %s20
      %v257 = vld [vmem:[%s234] sm:$0xf]
      %v258 = vld [vmem:[%s234 + $0x4] sm:$0xf]
      %v259 = vld [vmem:[%s234 + $0x8] sm:$0x1]
      %v260 = vld [vmem:[%s234 + $0xc] sm:$0xf]
      %v261 = vld [vmem:[%s234 + $0x10] sm:$0xf]
      %v262 = vld [vmem:[%s234 + $0x14] sm:$0x1]
      %v263 = vld [vmem:[%s234 + $0x18] sm:$0xf]
      %v264 = vld [vmem:[%s234 + $0x1c] sm:$0xf]
      %v265 = vld [vmem:[%s234 + $0x20] sm:$0x1]
      %v266 = vld [vmem:[%s234 + $0x24] sm:$0xf]
      %v267 = vld [vmem:[%s234 + $0x28] sm:$0xf]
      %v268 = vld [vmem:[%s234 + $0x2c] sm:$0x1]
      %v269 = vld [vmem:[%s234 + $0x30] sm:$0xf]
      %v270 = vld [vmem:[%s234 + $0x34] sm:$0xf]
      %v271 = vld [vmem:[%s234 + $0x38] sm:$0x1]
      %v272 = vld [vmem:[%s234 + $0x3c] sm:$0xf]
      %v273 = vld [vmem:[%s234 + $0x40] sm:$0xf]
      %v274 = vld [vmem:[%s234 + $0x44] sm:$0x1]
      %v275 = vld [vmem:[%s234 + $0x48] sm:$0xf]
      %v276 = vld [vmem:[%s234 + $0x4c] sm:$0xf]
      %v277 = vld [vmem:[%s234 + $0x50] sm:$0x1]
      %v278 = vld [vmem:[%s234 + $0x54] sm:$0xf]
      %v279 = vld [vmem:[%s234 + $0x58] sm:$0xf]
      %v280 = vld [vmem:[%s234 + $0x5c] sm:$0x1]
      %v281 = vld [vmem:[%s234 + $0x60] sm:$0xf]
      %v282 = vld [vmem:[%s234 + $0x64] sm:$0xf]
      %v283 = vld [vmem:[%s234 + $0x68] sm:$0x1]
      %v284 = vld [vmem:[%s234 + $0x6c] sm:$0xf]
      %v285 = vld [vmem:[%s234 + $0x70] sm:$0xf]
      %v286 = vld [vmem:[%s234 + $0x74] sm:$0x1]
      %v287 = vld [vmem:[%s238] sm:$0x3]
      %vm288 = vsmask.f32 3328
      %vm289 = vsmask.f32 7440
      %vm290 = vmor %vm288, %vm289
      %v292 = vshrl.u32 %v257, 16
      %v294 = vrot.slane %v292, 4
      %v295 = vshll.u32 %v257, 16
      %v297 = vrot.slane %v295, 5
      %v298 = vor.u32 %v294, %v297
      %v299 = vrot.slane %v298, 4
      %v301 = vshll.u32 %v258, 16
      %v303 = vrot.slane %v301, 5
      %v304 = vsel %vm290, %v299, %v303
      %v305 = vshrl.u32 %v258, 16
      %v307 = vrot.slane %v305, 4
      %v308 = vor.u32 %v307, %v303
      %v309 = vrot.slane %v308, 4
      %v311 = vshll.u32 %v259, 16
      %v313 = vrot.slane %v311, 5
      %v314 = vsel %vm290, %v309, %v313
      %v316 = vshrl.u32 %v260, 16
      %v318 = vrot.slane %v316, 4
      %v319 = vshll.u32 %v260, 16
      %v321 = vrot.slane %v319, 5
      %v322 = vor.u32 %v318, %v321
      %v323 = vrot.slane %v322, 4
      %v325 = vshll.u32 %v261, 16
      %v327 = vrot.slane %v325, 5
      %v328 = vsel %vm290, %v323, %v327
      %v329 = vshrl.u32 %v261, 16
      %v331 = vrot.slane %v329, 4
      %v332 = vor.u32 %v331, %v327
      %v333 = vrot.slane %v332, 4
      %v335 = vshll.u32 %v262, 16
      %v337 = vrot.slane %v335, 5
      %v338 = vsel %vm290, %v333, %v337
      %v340 = vshrl.u32 %v263, 16
      %v342 = vrot.slane %v340, 4
      %v343 = vshll.u32 %v263, 16
      %v345 = vrot.slane %v343, 5
      %v346 = vor.u32 %v342, %v345
      %v347 = vrot.slane %v346, 4
      %v349 = vshll.u32 %v264, 16
      %v351 = vrot.slane %v349, 5
      %v352 = vsel %vm290, %v347, %v351
      %v353 = vshrl.u32 %v264, 16
      %v355 = vrot.slane %v353, 4
      %v356 = vor.u32 %v355, %v351
      %v357 = vrot.slane %v356, 4
      %v359 = vshll.u32 %v265, 16
      %v361 = vrot.slane %v359, 5
      %v362 = vsel %vm290, %v357, %v361
      %v364 = vshrl.u32 %v266, 16
      %v366 = vrot.slane %v364, 4
      %v367 = vshll.u32 %v266, 16
      %v369 = vrot.slane %v367, 5
      %v370 = vor.u32 %v366, %v369
      %v371 = vrot.slane %v370, 4
      %v373 = vshll.u32 %v267, 16
      %v375 = vrot.slane %v373, 5
      %v376 = vsel %vm290, %v371, %v375
      %v377 = vshrl.u32 %v267, 16
      %v379 = vrot.slane %v377, 4
      %v380 = vor.u32 %v379, %v375
      %v381 = vrot.slane %v380, 4
      %v383 = vshll.u32 %v268, 16
      %v385 = vrot.slane %v383, 5
      %v386 = vsel %vm290, %v381, %v385
      %v388 = vshrl.u32 %v269, 16
      %v390 = vrot.slane %v388, 4
      %v391 = vshll.u32 %v269, 16
      %v393 = vrot.slane %v391, 5
      %v394 = vor.u32 %v390, %v393
      %v395 = vrot.slane %v394, 4
      %v397 = vshll.u32 %v270, 16
      %v399 = vrot.slane %v397, 5
      %v400 = vsel %vm290, %v395, %v399
      %v401 = vshrl.u32 %v270, 16
      %v403 = vrot.slane %v401, 4
      %v404 = vor.u32 %v403, %v399
      %v405 = vrot.slane %v404, 4
      %v407 = vshll.u32 %v271, 16
      %v409 = vrot.slane %v407, 5
      %v410 = vsel %vm290, %v405, %v409
      %v412 = vshrl.u32 %v272, 16
      %v414 = vrot.slane %v412, 4
      %v415 = vshll.u32 %v272, 16
      %v417 = vrot.slane %v415, 5
      %v418 = vor.u32 %v414, %v417
      %v419 = vrot.slane %v418, 4
      %v421 = vshll.u32 %v273, 16
      %v423 = vrot.slane %v421, 5
      %v424 = vsel %vm290, %v419, %v423
      %v425 = vshrl.u32 %v273, 16
      %v427 = vrot.slane %v425, 4
      %v428 = vor.u32 %v427, %v423
      %v429 = vrot.slane %v428, 4
      %v431 = vshll.u32 %v274, 16
      %v433 = vrot.slane %v431, 5
      %v434 = vsel %vm290, %v429, %v433
      %v436 = vshrl.u32 %v275, 16
      %v438 = vrot.slane %v436, 4
      %v439 = vshll.u32 %v275, 16
      %v441 = vrot.slane %v439, 5
      %v442 = vor.u32 %v438, %v441
      %v443 = vrot.slane %v442, 4
      %v445 = vshll.u32 %v276, 16
      %v447 = vrot.slane %v445, 5
      %v448 = vsel %vm290, %v443, %v447
      %v449 = vshrl.u32 %v276, 16
      %v451 = vrot.slane %v449, 4
      %v452 = vor.u32 %v451, %v447
      %v453 = vrot.slane %v452, 4
      %v455 = vshll.u32 %v277, 16
      %v457 = vrot.slane %v455, 5
      %v458 = vsel %vm290, %v453, %v457
      %v460 = vshrl.u32 %v278, 16
      %v462 = vrot.slane %v460, 4
      %v463 = vshll.u32 %v278, 16
      %v465 = vrot.slane %v463, 5
      %v466 = vor.u32 %v462, %v465
      %v467 = vrot.slane %v466, 4
      %v469 = vshll.u32 %v279, 16
      %v471 = vrot.slane %v469, 5
      %v472 = vsel %vm290, %v467, %v471
      %v473 = vshrl.u32 %v279, 16
      %v475 = vrot.slane %v473, 4
      %v476 = vor.u32 %v475, %v471
      %v477 = vrot.slane %v476, 4
      %v479 = vshll.u32 %v280, 16
      %v481 = vrot.slane %v479, 5
      %v482 = vsel %vm290, %v477, %v481
      %s483 = scalar_lea.vmem %s238, 2
      %v484 = vld [vmem:[%s483] sm:$0x3]
      %v485 = vunpack.c.l.b16 %v304
      %v486 = vunpack.c.l.b16 %v314
      %v487 = vunpack.c.l.b16 %v328
      %v488 = vunpack.c.l.b16 %v338
      %v489 = vunpack.c.l.b16 %v352
      %v490 = vunpack.c.l.b16 %v362
      %v491 = vunpack.c.l.b16 %v376
      %v492 = vunpack.c.l.b16 %v386
      %v493 = vunpack.c.l.b16 %v400
      %v494 = vunpack.c.l.b16 %v410
      %v495 = vunpack.c.l.b16 %v424
      %v496 = vunpack.c.l.b16 %v434
      %v497 = vunpack.c.l.b16 %v448
      %v498 = vunpack.c.l.b16 %v458
      %v499 = vunpack.c.l.b16 %v472
      %v500 = vunpack.c.l.b16 %v482
      %v501 = vpack.c.b16 %v486, %v485
      %v502 = vpack.c.b16 %v488, %v487
      %v503 = vpack.c.b16 %v490, %v489
      %v504 = vpack.c.b16 %v492, %v491
      %v505 = vpack.c.b16 %v494, %v493
      %v506 = vpack.c.b16 %v496, %v495
      %v507 = vpack.c.b16 %v498, %v497
      %v508 = vpack.c.b16 %v500, %v499
      %vm509 = vcmask 31744
      %v511 = vsel %vm509, %v501, 0
      %v514 = vsel %vm509, %v502, 0
      %v517 = vsel %vm509, %v503, 0
      %v520 = vsel %vm509, %v504, 0
      %v523 = vsel %vm509, %v505, 0
      %v526 = vsel %vm509, %v506, 0
      %v529 = vsel %vm509, %v507, 0
      %v532 = vsel %vm509, %v508, 0
      %vm534 = vcmask 1041408
      %v536 = vsel %vm534, %v484, 0
      %538 = vmatprep.subr.bf16.mxu0 0
      %539 = vmatpush1.bf16.msra.mxu0 %v536
      %540 = vmatprep.subr.bf16.mxu0 0
      %541 = vmatpush1.bf16.msra.mxu0 0
      %542 = vmatprep.subr.bf16.mxu0 0
      %543 = vmatpush1.bf16.msra.mxu0 0
      %544 = vmatprep.subr.bf16.mxu0 0
      %545 = vmatpush1.bf16.msra.mxu0 0
      %546 = vmatprep.subr.bf16.mxu0 0
      %547 = vmatpush1.bf16.msra.mxu0 0
      %548 = vmatprep.subr.bf16.mxu0 0
      %549 = vmatpush1.bf16.msra.mxu0 0
      %550 = vmatprep.subr.bf16.mxu0 0
      %551 = vmatpush1.bf16.msra.mxu0 0
      %552 = vmatprep.subr.bf16.mxu0 0
      %553 = vmatpush1.bf16.msra.mxu0 0
      %554 = vmatprep.subr.bf16.mxu0 0
      %555 = vmatpush1.bf16.msra.mxu0 0
      %556 = vmatprep.subr.bf16.mxu0 0
      %557 = vmatpush1.bf16.msra.mxu0 0
      %558 = vmatprep.subr.bf16.mxu0 0
      %559 = vmatpush1.bf16.msra.mxu0 0
      %560 = vmatprep.subr.bf16.mxu0 0
      %561 = vmatpush1.bf16.msra.mxu0 0
      %562 = vmatprep.subr.bf16.mxu0 0
      %563 = vmatpush1.bf16.msra.mxu0 0
      %564 = vmatprep.subr.bf16.mxu0 0
      %565 = vmatpush1.bf16.msra.mxu0 0
      %566 = vmatprep.subr.bf16.mxu0 0
      %567 = vmatpush1.bf16.msra.mxu0 0
      %568 = vmatprep.subr.bf16.mxu0 0
      %569 = vmatpush1.bf16.msra.mxu0 0
      %570 = vmatprep.mubr.bf16.mxu0 0
      %571 = vmatmul.mubr.bf16.gmra.mrb[0].mxu0 %v511
      %v572 = vpop.f32.mrb[0].mxu0
      %v573 = vadd.f32 0.0, %v572
      %v574 = vpop.f32.mrb[0].mxu0
      %v575 = vpop.f32.mrb[0].mxu0
      %v576 = vadd.f32 0.0, %v575
      %v577 = vpop.f32.mrb[0].mxu0
      %578 = vmatprep.mubr.bf16.mxu0 0
      %579 = vmatmul.mubr.bf16.gmra.mrb[0].mxu0 %v514
      %v580 = vpop.f32.mrb[0].mxu0
      %v581 = vadd.f32 0.0, %v580
      %v582 = vpop.f32.mrb[0].mxu0
      %v583 = vpop.f32.mrb[0].mxu0
      %v584 = vadd.f32 0.0, %v583
      %v585 = vpop.f32.mrb[0].mxu0
      %586 = vmatprep.mubr.bf16.mxu0 0
      %587 = vmatmul.mubr.bf16.gmra.mrb[0].mxu0 %v517
      %v588 = vpop.f32.mrb[0].mxu0
      %v589 = vadd.f32 0.0, %v588
      %v590 = vpop.f32.mrb[0].mxu0
      %v591 = vpop.f32.mrb[0].mxu0
      %v592 = vadd.f32 0.0, %v591
      %v593 = vpop.f32.mrb[0].mxu0
      %594 = vmatprep.mubr.bf16.mxu0 0
      %595 = vmatmul.mubr.bf16.gmra.mrb[0].mxu0 %v520
      %v596 = vpop.f32.mrb[0].mxu0
      %v597 = vadd.f32 0.0, %v596
      %v598 = vpop.f32.mrb[0].mxu0
      %v599 = vpop.f32.mrb[0].mxu0
      %v600 = vadd.f32 0.0, %v599
      %v601 = vpop.f32.mrb[0].mxu0
      %602 = vmatprep.mubr.bf16.mxu0 0
      %603 = vmatmul.mubr.bf16.gmra.mrb[0].mxu0 %v523
      %v604 = vpop.f32.mrb[0].mxu0
      %v605 = vadd.f32 0.0, %v604
      %v606 = vpop.f32.mrb[0].mxu0
      %v607 = vpop.f32.mrb[0].mxu0
      %v608 = vadd.f32 0.0, %v607
      %v609 = vpop.f32.mrb[0].mxu0
      %610 = vmatprep.mubr.bf16.mxu0 0
      %611 = vmatmul.mubr.bf16.gmra.mrb[0].mxu0 %v526
      %v612 = vpop.f32.mrb[0].mxu0
      %v613 = vadd.f32 0.0, %v612
      %v614 = vpop.f32.mrb[0].mxu0
      %v615 = vpop.f32.mrb[0].mxu0
      %v616 = vadd.f32 0.0, %v615
      %v617 = vpop.f32.mrb[0].mxu0
      %618 = vmatprep.mubr.bf16.mxu0 0
      %619 = vmatmul.mubr.bf16.gmra.mrb[0].mxu0 %v529
      %v620 = vpop.f32.mrb[0].mxu0
      %v621 = vadd.f32 0.0, %v620
      %v622 = vpop.f32.mrb[0].mxu0
      %v623 = vpop.f32.mrb[0].mxu0
      %v624 = vadd.f32 0.0, %v623
      %v625 = vpop.f32.mrb[0].mxu0
      %626 = vmatprep.mubr.bf16.mxu0 0
      %627 = vmatmul.mubr.bf16.gmra.mrb[0].mxu0 %v532
      %v628 = vpop.f32.mrb[0].mxu0
      %v629 = vadd.f32 0.0, %v628
      %v630 = vpop.f32.mrb[0].mxu0
      %v631 = vpop.f32.mrb[0].mxu0
      %v632 = vadd.f32 0.0, %v631
      %v633 = vpop.f32.mrb[0].mxu0
      %634 = vdwg.mxu0
      %v651 = vunpack.c.l.b16 %v257
      %v652 = vunpack.c.l.b16 %v258
      %v653 = vunpack.c.l.b16 %v260
      %v654 = vunpack.c.l.b16 %v261
      %v655 = vunpack.c.l.b16 %v263
      %v656 = vunpack.c.l.b16 %v264
      %v657 = vunpack.c.l.b16 %v266
      %v658 = vunpack.c.l.b16 %v267
      %v659 = vunpack.c.l.b16 %v269
      %v660 = vunpack.c.l.b16 %v270
      %v661 = vunpack.c.l.b16 %v272
      %v662 = vunpack.c.l.b16 %v273
      %v663 = vunpack.c.l.b16 %v275
      %v664 = vunpack.c.l.b16 %v276
      %v665 = vunpack.c.l.b16 %v278
      %v666 = vunpack.c.l.b16 %v279
      %v667 = vpack.c.b16 %v652, %v651
      %v668 = vpack.c.b16 %v654, %v653
      %v669 = vpack.c.b16 %v656, %v655
      %v670 = vpack.c.b16 %v658, %v657
      %v671 = vpack.c.b16 %v660, %v659
      %v672 = vpack.c.b16 %v662, %v661
      %v673 = vpack.c.b16 %v664, %v663
      %v674 = vpack.c.b16 %v666, %v665
      %v676 = vsel %vm509, %v667, 0
      %v679 = vsel %vm509, %v668, 0
      %v682 = vsel %vm509, %v669, 0
      %v685 = vsel %vm509, %v670, 0
      %v688 = vsel %vm509, %v671, 0
      %v691 = vsel %vm509, %v672, 0
      %v694 = vsel %vm509, %v673, 0
      %v697 = vsel %vm509, %v674, 0
      %v700 = vsel %vm534, %v287, 0
      %702 = vmatprep.subr.bf16.mxu0 0
      %703 = vmatpush1.bf16.msra.mxu0 %v700
      %704 = vmatprep.subr.bf16.mxu0 0
      %705 = vmatpush1.bf16.msra.mxu0 0
      %706 = vmatprep.subr.bf16.mxu0 0
      %707 = vmatpush1.bf16.msra.mxu0 0
      %708 = vmatprep.subr.bf16.mxu0 0
      %709 = vmatpush1.bf16.msra.mxu0 0
      %710 = vmatprep.subr.bf16.mxu0 0
      %711 = vmatpush1.bf16.msra.mxu0 0
      %712 = vmatprep.subr.bf16.mxu0 0
      %713 = vmatpush1.bf16.msra.mxu0 0
      %714 = vmatprep.subr.bf16.mxu0 0
      %715 = vmatpush1.bf16.msra.mxu0 0
      %716 = vmatprep.subr.bf16.mxu0 0
      %717 = vmatpush1.bf16.msra.mxu0 0
      %718 = vmatprep.subr.bf16.mxu0 0
      %719 = vmatpush1.bf16.msra.mxu0 0
      %720 = vmatprep.subr.bf16.mxu0 0
      %721 = vmatpush1.bf16.msra.mxu0 0
      %722 = vmatprep.subr.bf16.mxu0 0
      %723 = vmatpush1.bf16.msra.mxu0 0
      %724 = vmatprep.subr.bf16.mxu0 0
      %725 = vmatpush1.bf16.msra.mxu0 0
      %726 = vmatprep.subr.bf16.mxu0 0
      %727 = vmatpush1.bf16.msra.mxu0 0
      %728 = vmatprep.subr.bf16.mxu0 0
      %729 = vmatpush1.bf16.msra.mxu0 0
      %730 = vmatprep.subr.bf16.mxu0 0
      %731 = vmatpush1.bf16.msra.mxu0 0
      %732 = vmatprep.subr.bf16.mxu0 0
      %733 = vmatpush1.bf16.msra.mxu0 0
      %734 = vmatprep.mubr.bf16.mxu0 0
      %735 = vmatmul.mubr.bf16.gmra.mrb[0].mxu0 %v676
      %v736 = vpop.f32.mrb[0].mxu0
      %v737 = vadd.f32 %v573, %v736
      %v738 = vpop.f32.mrb[0].mxu0
      %v739 = vpop.f32.mrb[0].mxu0
      %v740 = vadd.f32 %v576, %v739
      %v741 = vpop.f32.mrb[0].mxu0
      %742 = vmatprep.mubr.bf16.mxu0 0
      %743 = vmatmul.mubr.bf16.gmra.mrb[0].mxu0 %v679
      %v744 = vpop.f32.mrb[0].mxu0
      %v745 = vadd.f32 %v581, %v744
      %v746 = vpop.f32.mrb[0].mxu0
      %v747 = vpop.f32.mrb[0].mxu0
      %v748 = vadd.f32 %v584, %v747
      %v749 = vpop.f32.mrb[0].mxu0
      %750 = vmatprep.mubr.bf16.mxu0 0
      %751 = vmatmul.mubr.bf16.gmra.mrb[0].mxu0 %v682
      %v752 = vpop.f32.mrb[0].mxu0
      %v753 = vadd.f32 %v589, %v752
      %v754 = vpop.f32.mrb[0].mxu0
      %v755 = vpop.f32.mrb[0].mxu0
      %v756 = vadd.f32 %v592, %v755
      %v757 = vpop.f32.mrb[0].mxu0
      %758 = vmatprep.mubr.bf16.mxu0 0
      %759 = vmatmul.mubr.bf16.gmra.mrb[0].mxu0 %v685
      %v760 = vpop.f32.mrb[0].mxu0
      %v761 = vadd.f32 %v597, %v760
      %v762 = vpop.f32.mrb[0].mxu0
      %v763 = vpop.f32.mrb[0].mxu0
      %v764 = vadd.f32 %v600, %v763
      %v765 = vpop.f32.mrb[0].mxu0
      %766 = vmatprep.mubr.bf16.mxu0 0
      %767 = vmatmul.mubr.bf16.gmra.mrb[0].mxu0 %v688
      %v768 = vpop.f32.mrb[0].mxu0
      %v769 = vadd.f32 %v605, %v768
      %v770 = vpop.f32.mrb[0].mxu0
      %v771 = vpop.f32.mrb[0].mxu0
      %v772 = vadd.f32 %v608, %v771
      %v773 = vpop.f32.mrb[0].mxu0
      %774 = vmatprep.mubr.bf16.mxu0 0
      %775 = vmatmul.mubr.bf16.gmra.mrb[0].mxu0 %v691
      %v776 = vpop.f32.mrb[0].mxu0
      %v777 = vadd.f32 %v613, %v776
      %v778 = vpop.f32.mrb[0].mxu0
      %v779 = vpop.f32.mrb[0].mxu0
      %v780 = vadd.f32 %v616, %v779
      %v781 = vpop.f32.mrb[0].mxu0
      %782 = vmatprep.mubr.bf16.mxu0 0
      %783 = vmatmul.mubr.bf16.gmra.mrb[0].mxu0 %v694
      %v784 = vpop.f32.mrb[0].mxu0
      %v785 = vadd.f32 %v621, %v784
      %v786 = vpop.f32.mrb[0].mxu0
      %v787 = vpop.f32.mrb[0].mxu0
      %v788 = vadd.f32 %v624, %v787
      %v789 = vpop.f32.mrb[0].mxu0
      %790 = vmatprep.mubr.bf16.mxu0 0
      %791 = vmatmul.mubr.bf16.gmra.mrb[0].mxu0 %v697
      %v792 = vpop.f32.mrb[0].mxu0
      %v793 = vadd.f32 %v629, %v792
      %v794 = vpop.f32.mrb[0].mxu0
      %v795 = vpop.f32.mrb[0].mxu0
      %v796 = vadd.f32 %v632, %v795
      %v797 = vpop.f32.mrb[0].mxu0
      %798 = vdwg.mxu0
      %vm807 = vcmask 1042432
      %vm808 = vcmask 1046532
      %vm809 = vmor %vm807, %vm808
      %v810 = vrot.slane %v257, 5
      %v811 = vrot.slane %v810, 4
      %v812 = vrot.slane %v258, 5
      %v813 = vsel %vm809, %v811, %v812
      %v814 = vrot.slane %v812, 4
      %v815 = vrot.slane %v259, 5
      %v816 = vsel %vm809, %v814, %v815
      %v817 = vrot.slane %v260, 5
      %v818 = vrot.slane %v817, 4
      %v819 = vrot.slane %v261, 5
      %v820 = vsel %vm809, %v818, %v819
      %v821 = vrot.slane %v819, 4
      %v822 = vrot.slane %v262, 5
      %v823 = vsel %vm809, %v821, %v822
      %v824 = vrot.slane %v263, 5
      %v825 = vrot.slane %v824, 4
      %v826 = vrot.slane %v264, 5
      %v827 = vsel %vm809, %v825, %v826
      %v828 = vrot.slane %v826, 4
      %v829 = vrot.slane %v265, 5
      %v830 = vsel %vm809, %v828, %v829
      %v831 = vrot.slane %v266, 5
      %v832 = vrot.slane %v831, 4
      %v833 = vrot.slane %v267, 5
      %v834 = vsel %vm809, %v832, %v833
      %v835 = vrot.slane %v833, 4
      %v836 = vrot.slane %v268, 5
      %v837 = vsel %vm809, %v835, %v836
      %v838 = vrot.slane %v269, 5
      %v839 = vrot.slane %v838, 4
      %v840 = vrot.slane %v270, 5
      %v841 = vsel %vm809, %v839, %v840
      %v842 = vrot.slane %v840, 4
      %v843 = vrot.slane %v271, 5
      %v844 = vsel %vm809, %v842, %v843
      %v845 = vrot.slane %v272, 5
      %v846 = vrot.slane %v845, 4
      %v847 = vrot.slane %v273, 5
      %v848 = vsel %vm809, %v846, %v847
      %v849 = vrot.slane %v847, 4
      %v850 = vrot.slane %v274, 5
      %v851 = vsel %vm809, %v849, %v850
      %v852 = vrot.slane %v275, 5
      %v853 = vrot.slane %v852, 4
      %v854 = vrot.slane %v276, 5
      %v855 = vsel %vm809, %v853, %v854
      %v856 = vrot.slane %v854, 4
      %v857 = vrot.slane %v277, 5
      %v858 = vsel %vm809, %v856, %v857
      %v859 = vrot.slane %v278, 5
      %v860 = vrot.slane %v859, 4
      %v861 = vrot.slane %v279, 5
      %v862 = vsel %vm809, %v860, %v861
      %v863 = vrot.slane %v861, 4
      %v864 = vrot.slane %v280, 5
      %v865 = vsel %vm809, %v863, %v864
      %s866 = scalar_lea.vmem %s238, 4
      %v867 = vld [vmem:[%s866] sm:$0x3]
      %v868 = vunpack.c.l.b16 %v813
      %v869 = vunpack.c.l.b16 %v816
      %v870 = vunpack.c.l.b16 %v820
      %v871 = vunpack.c.l.b16 %v823
      %v872 = vunpack.c.l.b16 %v827
      %v873 = vunpack.c.l.b16 %v830
      %v874 = vunpack.c.l.b16 %v834
      %v875 = vunpack.c.l.b16 %v837
      %v876 = vunpack.c.l.b16 %v841
      %v877 = vunpack.c.l.b16 %v844
      %v878 = vunpack.c.l.b16 %v848
      %v879 = vunpack.c.l.b16 %v851
      %v880 = vunpack.c.l.b16 %v855
      %v881 = vunpack.c.l.b16 %v858
      %v882 = vunpack.c.l.b16 %v862
      %v883 = vunpack.c.l.b16 %v865
      %v884 = vpack.c.b16 %v869, %v868
      %v885 = vpack.c.b16 %v871, %v870
      %v886 = vpack.c.b16 %v873, %v872
      %v887 = vpack.c.b16 %v875, %v874
      %v888 = vpack.c.b16 %v877, %v876
      %v889 = vpack.c.b16 %v879, %v878
      %v890 = vpack.c.b16 %v881, %v880
      %v891 = vpack.c.b16 %v883, %v882
      %v893 = vsel %vm509, %v884, 0
      %v896 = vsel %vm509, %v885, 0
      %v899 = vsel %vm509, %v886, 0
      %v902 = vsel %vm509, %v887, 0
      %v905 = vsel %vm509, %v888, 0
      %v908 = vsel %vm509, %v889, 0
      %v911 = vsel %vm509, %v890, 0
      %v914 = vsel %vm509, %v891, 0
      %v917 = vsel %vm534, %v867, 0
      %919 = vmatprep.subr.bf16.mxu0 0
      %920 = vmatpush1.bf16.msra.mxu0 %v917
      %921 = vmatprep.subr.bf16.mxu0 0
      %922 = vmatpush1.bf16.msra.mxu0 0
      %923 = vmatprep.subr.bf16.mxu0 0
      %924 = vmatpush1.bf16.msra.mxu0 0
      %925 = vmatprep.subr.bf16.mxu0 0
      %926 = vmatpush1.bf16.msra.mxu0 0
      %927 = vmatprep.subr.bf16.mxu0 0
      %928 = vmatpush1.bf16.msra.mxu0 0
      %929 = vmatprep.subr.bf16.mxu0 0
      %930 = vmatpush1.bf16.msra.mxu0 0
      %931 = vmatprep.subr.bf16.mxu0 0
      %932 = vmatpush1.bf16.msra.mxu0 0
      %933 = vmatprep.subr.bf16.mxu0 0
      %934 = vmatpush1.bf16.msra.mxu0 0
      %935 = vmatprep.subr.bf16.mxu0 0
      %936 = vmatpush1.bf16.msra.mxu0 0
      %937 = vmatprep.subr.bf16.mxu0 0
      %938 = vmatpush1.bf16.msra.mxu0 0
      %939 = vmatprep.subr.bf16.mxu0 0
      %940 = vmatpush1.bf16.msra.mxu0 0
      %941 = vmatprep.subr.bf16.mxu0 0
      %942 = vmatpush1.bf16.msra.mxu0 0
      %943 = vmatprep.subr.bf16.mxu0 0
      %944 = vmatpush1.bf16.msra.mxu0 0
      %945 = vmatprep.subr.bf16.mxu0 0
      %946 = vmatpush1.bf16.msra.mxu0 0
      %947 = vmatprep.subr.bf16.mxu0 0
      %948 = vmatpush1.bf16.msra.mxu0 0
      %949 = vmatprep.subr.bf16.mxu0 0
      %950 = vmatpush1.bf16.msra.mxu0 0
      %951 = vmatprep.mubr.bf16.mxu0 0
      %952 = vmatmul.mubr.bf16.gmra.mrb[0].mxu0 %v893
      %v953 = vpop.f32.mrb[0].mxu0
      %v954 = vadd.f32 0.0, %v953
      %v955 = vpop.f32.mrb[0].mxu0
      %v956 = vpop.f32.mrb[0].mxu0
      %v957 = vadd.f32 0.0, %v956
      %v958 = vpop.f32.mrb[0].mxu0
      %959 = vmatprep.mubr.bf16.mxu0 0
      %960 = vmatmul.mubr.bf16.gmra.mrb[0].mxu0 %v896
      %v961 = vpop.f32.mrb[0].mxu0
      %v962 = vadd.f32 0.0, %v961
      %v963 = vpop.f32.mrb[0].mxu0
      %v964 = vpop.f32.mrb[0].mxu0
      %v965 = vadd.f32 0.0, %v964
      %v966 = vpop.f32.mrb[0].mxu0
      %967 = vmatprep.mubr.bf16.mxu0 0
      %968 = vmatmul.mubr.bf16.gmra.mrb[0].mxu0 %v899
      %v969 = vpop.f32.mrb[0].mxu0
      %v970 = vadd.f32 0.0, %v969
      %v971 = vpop.f32.mrb[0].mxu0
      %v972 = vpop.f32.mrb[0].mxu0
      %v973 = vadd.f32 0.0, %v972
      %v974 = vpop.f32.mrb[0].mxu0
      %975 = vmatprep.mubr.bf16.mxu0 0
      %976 = vmatmul.mubr.bf16.gmra.mrb[0].mxu0 %v902
      %v977 = vpop.f32.mrb[0].mxu0
      %v978 = vadd.f32 0.0, %v977
      %v979 = vpop.f32.mrb[0].mxu0
      %v980 = vpop.f32.mrb[0].mxu0
      %v981 = vadd.f32 0.0, %v980
      %v982 = vpop.f32.mrb[0].mxu0
      %983 = vmatprep.mubr.bf16.mxu0 0
      %984 = vmatmul.mubr.bf16.gmra.mrb[0].mxu0 %v905
      %v985 = vpop.f32.mrb[0].mxu0
      %v986 = vadd.f32 0.0, %v985
      %v987 = vpop.f32.mrb[0].mxu0
      %v988 = vpop.f32.mrb[0].mxu0
      %v989 = vadd.f32 0.0, %v988
      %v990 = vpop.f32.mrb[0].mxu0
      %991 = vmatprep.mubr.bf16.mxu0 0
      %992 = vmatmul.mubr.bf16.gmra.mrb[0].mxu0 %v908
      %v993 = vpop.f32.mrb[0].mxu0
      %v994 = vadd.f32 0.0, %v993
      %v995 = vpop.f32.mrb[0].mxu0
      %v996 = vpop.f32.mrb[0].mxu0
      %v997 = vadd.f32 0.0, %v996
      %v998 = vpop.f32.mrb[0].mxu0
      %999 = vmatprep.mubr.bf16.mxu0 0
      %1000 = vmatmul.mubr.bf16.gmra.mrb[0].mxu0 %v911
      %v1001 = vpop.f32.mrb[0].mxu0
      %v1002 = vadd.f32 0.0, %v1001
      %v1003 = vpop.f32.mrb[0].mxu0
      %v1004 = vpop.f32.mrb[0].mxu0
      %v1005 = vadd.f32 0.0, %v1004
      %v1006 = vpop.f32.mrb[0].mxu0
      %1007 = vmatprep.mubr.bf16.mxu0 0
      %1008 = vmatmul.mubr.bf16.gmra.mrb[0].mxu0 %v914
      %v1009 = vpop.f32.mrb[0].mxu0
      %v1010 = vadd.f32 0.0, %v1009
      %v1011 = vpop.f32.mrb[0].mxu0
      %v1012 = vpop.f32.mrb[0].mxu0
      %v1013 = vadd.f32 0.0, %v1012
      %v1014 = vpop.f32.mrb[0].mxu0
      %1015 = vdwg.mxu0
      %v1016 = vadd.f32 %v737, %v954
      %v1017 = vadd.f32 %v740, %v957
      %v1018 = vadd.f32 %v745, %v962
      %v1019 = vadd.f32 %v748, %v965
      %v1020 = vadd.f32 %v753, %v970
      %v1021 = vadd.f32 %v756, %v973
      %v1022 = vadd.f32 %v761, %v978
      %v1023 = vadd.f32 %v764, %v981
      %v1024 = vadd.f32 %v769, %v986
      %v1025 = vadd.f32 %v772, %v989
      %v1026 = vadd.f32 %v777, %v994
      %v1027 = vadd.f32 %v780, %v997
      %v1028 = vadd.f32 %v785, %v1002
      %v1029 = vadd.f32 %v788, %v1005
      %v1030 = vadd.f32 %v793, %v1010
      %v1031 = vadd.f32 %v796, %v1013
      %s1032 = scalar_lea.vmem %s238, 6
      %v1033 = vld [vmem:[%s1032] sm:$0x3]
      %v1036 = vunpack.c.l.b16 %v281
      %v1037 = vunpack.c.l.b16 %v282
      %v1038 = vpack.c.b16 %v1037, %v1036
      %v1040 = vsel %vm509, %v1038, 0
      %v1043 = vsel %vm534, %v1033, 0
      %1045 = vmatprep.subr.bf16.mxu0 0
      %1046 = vmatpush1.bf16.msra.mxu0 %v1043
      %1047 = vmatprep.subr.bf16.mxu0 0
      %1048 = vmatpush1.bf16.msra.mxu0 0
      %1049 = vmatprep.subr.bf16.mxu0 0
      %1050 = vmatpush1.bf16.msra.mxu0 0
      %1051 = vmatprep.subr.bf16.mxu0 0
      %1052 = vmatpush1.bf16.msra.mxu0 0
      %1053 = vmatprep.subr.bf16.mxu0 0
      %1054 = vmatpush1.bf16.msra.mxu0 0
      %1055 = vmatprep.subr.bf16.mxu0 0
      %1056 = vmatpush1.bf16.msra.mxu0 0
      %1057 = vmatprep.subr.bf16.mxu0 0
      %1058 = vmatpush1.bf16.msra.mxu0 0
      %1059 = vmatprep.subr.bf16.mxu0 0
      %1060 = vmatpush1.bf16.msra.mxu0 0
      %1061 = vmatprep.subr.bf16.mxu0 0
      %1062 = vmatpush1.bf16.msra.mxu0 0
      %1063 = vmatprep.subr.bf16.mxu0 0
      %1064 = vmatpush1.bf16.msra.mxu0 0
      %1065 = vmatprep.subr.bf16.mxu0 0
      %1066 = vmatpush1.bf16.msra.mxu0 0
      %1067 = vmatprep.subr.bf16.mxu0 0
      %1068 = vmatpush1.bf16.msra.mxu0 0
      %1069 = vmatprep.subr.bf16.mxu0 0
      %1070 = vmatpush1.bf16.msra.mxu0 0
      %1071 = vmatprep.subr.bf16.mxu0 0
      %1072 = vmatpush1.bf16.msra.mxu0 0
      %1073 = vmatprep.subr.bf16.mxu0 0
      %1074 = vmatpush1.bf16.msra.mxu0 0
      %1075 = vmatprep.subr.bf16.mxu0 0
      %1076 = vmatpush1.bf16.msra.mxu0 0
      %1077 = vmatprep.mubr.bf16.mxu0 0
      %1078 = vmatmul.mubr.bf16.gmra.mrb[0].mxu0 %v679
      %v1079 = vpop.f32.mrb[0].mxu0
      %v1080 = vadd.f32 0.0, %v1079
      %v1081 = vpop.f32.mrb[0].mxu0
      %v1082 = vpop.f32.mrb[0].mxu0
      %v1083 = vadd.f32 0.0, %v1082
      %v1084 = vpop.f32.mrb[0].mxu0
      %1085 = vmatprep.mubr.bf16.mxu0 0
      %1086 = vmatmul.mubr.bf16.gmra.mrb[0].mxu0 %v682
      %v1087 = vpop.f32.mrb[0].mxu0
      %v1088 = vadd.f32 0.0, %v1087
      %v1089 = vpop.f32.mrb[0].mxu0
      %v1090 = vpop.f32.mrb[0].mxu0
      %v1091 = vadd.f32 0.0, %v1090
      %v1092 = vpop.f32.mrb[0].mxu0
      %1093 = vmatprep.mubr.bf16.mxu0 0
      %1094 = vmatmul.mubr.bf16.gmra.mrb[0].mxu0 %v685
      %v1095 = vpop.f32.mrb[0].mxu0
      %v1096 = vadd.f32 0.0, %v1095
      %v1097 = vpop.f32.mrb[0].mxu0
      %v1098 = vpop.f32.mrb[0].mxu0
      %v1099 = vadd.f32 0.0, %v1098
      %v1100 = vpop.f32.mrb[0].mxu0
      %1101 = vmatprep.mubr.bf16.mxu0 0
      %1102 = vmatmul.mubr.bf16.gmra.mrb[0].mxu0 %v688
      %v1103 = vpop.f32.mrb[0].mxu0
      %v1104 = vadd.f32 0.0, %v1103
      %v1105 = vpop.f32.mrb[0].mxu0
      %v1106 = vpop.f32.mrb[0].mxu0
      %v1107 = vadd.f32 0.0, %v1106
      %v1108 = vpop.f32.mrb[0].mxu0
      %1109 = vmatprep.mubr.bf16.mxu0 0
      %1110 = vmatmul.mubr.bf16.gmra.mrb[0].mxu0 %v691
      %v1111 = vpop.f32.mrb[0].mxu0
      %v1112 = vadd.f32 0.0, %v1111
      %v1113 = vpop.f32.mrb[0].mxu0
      %v1114 = vpop.f32.mrb[0].mxu0
      %v1115 = vadd.f32 0.0, %v1114
      %v1116 = vpop.f32.mrb[0].mxu0
      %1117 = vmatprep.mubr.bf16.mxu0 0
      %1118 = vmatmul.mubr.bf16.gmra.mrb[0].mxu0 %v694
      %v1119 = vpop.f32.mrb[0].mxu0
      %v1120 = vadd.f32 0.0, %v1119
      %v1121 = vpop.f32.mrb[0].mxu0
      %v1122 = vpop.f32.mrb[0].mxu0
      %v1123 = vadd.f32 0.0, %v1122
      %v1124 = vpop.f32.mrb[0].mxu0
      %1125 = vmatprep.mubr.bf16.mxu0 0
      %1126 = vmatmul.mubr.bf16.gmra.mrb[0].mxu0 %v697
      %v1127 = vpop.f32.mrb[0].mxu0
      %v1128 = vadd.f32 0.0, %v1127
      %v1129 = vpop.f32.mrb[0].mxu0
      %v1130 = vpop.f32.mrb[0].mxu0
      %v1131 = vadd.f32 0.0, %v1130
      %v1132 = vpop.f32.mrb[0].mxu0
      %1133 = vmatprep.mubr.bf16.mxu0 0
      %1134 = vmatmul.mubr.bf16.gmra.mrb[0].mxu0 %v1040
      %v1135 = vpop.f32.mrb[0].mxu0
      %v1136 = vadd.f32 0.0, %v1135
      %v1137 = vpop.f32.mrb[0].mxu0
      %v1138 = vpop.f32.mrb[0].mxu0
      %v1139 = vadd.f32 0.0, %v1138
      %v1140 = vpop.f32.mrb[0].mxu0
      %1141 = vdwg.mxu0
      %v1142 = vadd.f32 %v1016, %v1080
      %v1143 = vadd.f32 %v1017, %v1083
      %v1144 = vadd.f32 %v1018, %v1088
      %v1145 = vadd.f32 %v1019, %v1091
      %v1146 = vadd.f32 %v1020, %v1096
      %v1147 = vadd.f32 %v1021, %v1099
      %v1148 = vadd.f32 %v1022, %v1104
      %v1149 = vadd.f32 %v1023, %v1107
      %v1150 = vadd.f32 %v1024, %v1112
      %v1151 = vadd.f32 %v1025, %v1115
      %v1152 = vadd.f32 %v1026, %v1120
      %v1153 = vadd.f32 %v1027, %v1123
      %v1154 = vadd.f32 %v1028, %v1128
      %v1155 = vadd.f32 %v1029, %v1131
      %v1156 = vadd.f32 %v1030, %v1136
      %v1157 = vadd.f32 %v1031, %v1139
      %v1159 = vshrl.u32 %v281, 16
      %v1161 = vrot.slane %v1159, 4
      %v1162 = vshll.u32 %v281, 16
      %v1164 = vrot.slane %v1162, 5
      %v1165 = vor.u32 %v1161, %v1164
      %v1166 = vrot.slane %v1165, 4
      %v1168 = vshll.u32 %v282, 16
      %v1170 = vrot.slane %v1168, 5
      %v1171 = vsel %vm290, %v1166, %v1170
      %v1172 = vshrl.u32 %v282, 16
      %v1174 = vrot.slane %v1172, 4
      %v1175 = vor.u32 %v1174, %v1170
      %v1176 = vrot.slane %v1175, 4
      %v1178 = vshll.u32 %v283, 16
      %v1180 = vrot.slane %v1178, 5
      %v1181 = vsel %vm290, %v1176, %v1180
      %s1182 = scalar_lea.vmem %s238, 8
      %v1183 = vld [vmem:[%s1182] sm:$0x3]
      %v1184 = vunpack.c.l.b16 %v1171
      %v1185 = vunpack.c.l.b16 %v1181
      %v1186 = vpack.c.b16 %v1185, %v1184
      %v1188 = vsel %vm509, %v1186, 0
      %v1191 = vsel %vm534, %v1183, 0
      %1193 = vmatprep.subr.bf16.mxu0 0
      %1194 = vmatpush1.bf16.msra.mxu0 %v1191
      %1195 = vmatprep.subr.bf16.mxu0 0
      %1196 = vmatpush1.bf16.msra.mxu0 0
      %1197 = vmatprep.subr.bf16.mxu0 0
      %1198 = vmatpush1.bf16.msra.mxu0 0
      %1199 = vmatprep.subr.bf16.mxu0 0
      %1200 = vmatpush1.bf16.msra.mxu0 0
      %1201 = vmatprep.subr.bf16.mxu0 0
      %1202 = vmatpush1.bf16.msra.mxu0 0
      %1203 = vmatprep.subr.bf16.mxu0 0
      %1204 = vmatpush1.bf16.msra.mxu0 0
      %1205 = vmatprep.subr.bf16.mxu0 0
      %1206 = vmatpush1.bf16.msra.mxu0 0
      %1207 = vmatprep.subr.bf16.mxu0 0
      %1208 = vmatpush1.bf16.msra.mxu0 0
      %1209 = vmatprep.subr.bf16.mxu0 0
      %1210 = vmatpush1.bf16.msra.mxu0 0
      %1211 = vmatprep.subr.bf16.mxu0 0
      %1212 = vmatpush1.bf16.msra.mxu0 0
      %1213 = vmatprep.subr.bf16.mxu0 0
      %1214 = vmatpush1.bf16.msra.mxu0 0
      %1215 = vmatprep.subr.bf16.mxu0 0
      %1216 = vmatpush1.bf16.msra.mxu0 0
      %1217 = vmatprep.subr.bf16.mxu0 0
      %1218 = vmatpush1.bf16.msra.mxu0 0
      %1219 = vmatprep.subr.bf16.mxu0 0
      %1220 = vmatpush1.bf16.msra.mxu0 0
      %1221 = vmatprep.subr.bf16.mxu0 0
      %1222 = vmatpush1.bf16.msra.mxu0 0
      %1223 = vmatprep.subr.bf16.mxu0 0
      %1224 = vmatpush1.bf16.msra.mxu0 0
      %1225 = vmatprep.mubr.bf16.mxu0 0
      %1226 = vmatmul.mubr.bf16.gmra.mrb[0].mxu0 %v514
      %v1227 = vpop.f32.mrb[0].mxu0
      %v1228 = vadd.f32 0.0, %v1227
      %v1229 = vpop.f32.mrb[0].mxu0
      %v1230 = vpop.f32.mrb[0].mxu0
      %v1231 = vadd.f32 0.0, %v1230
      %v1232 = vpop.f32.mrb[0].mxu0
      %1233 = vmatprep.mubr.bf16.mxu0 0
      %1234 = vmatmul.mubr.bf16.gmra.mrb[0].mxu0 %v517
      %v1235 = vpop.f32.mrb[0].mxu0
      %v1236 = vadd.f32 0.0, %v1235
      %v1237 = vpop.f32.mrb[0].mxu0
      %v1238 = vpop.f32.mrb[0].mxu0
      %v1239 = vadd.f32 0.0, %v1238
      %v1240 = vpop.f32.mrb[0].mxu0
      %1241 = vmatprep.mubr.bf16.mxu0 0
      %1242 = vmatmul.mubr.bf16.gmra.mrb[0].mxu0 %v520
      %v1243 = vpop.f32.mrb[0].mxu0
      %v1244 = vadd.f32 0.0, %v1243
      %v1245 = vpop.f32.mrb[0].mxu0
      %v1246 = vpop.f32.mrb[0].mxu0
      %v1247 = vadd.f32 0.0, %v1246
      %v1248 = vpop.f32.mrb[0].mxu0
      %1249 = vmatprep.mubr.bf16.mxu0 0
      %1250 = vmatmul.mubr.bf16.gmra.mrb[0].mxu0 %v523
      %v1251 = vpop.f32.mrb[0].mxu0
      %v1252 = vadd.f32 0.0, %v1251
      %v1253 = vpop.f32.mrb[0].mxu0
      %v1254 = vpop.f32.mrb[0].mxu0
      %v1255 = vadd.f32 0.0, %v1254
      %v1256 = vpop.f32.mrb[0].mxu0
      %1257 = vmatprep.mubr.bf16.mxu0 0
      %1258 = vmatmul.mubr.bf16.gmra.mrb[0].mxu0 %v526
      %v1259 = vpop.f32.mrb[0].mxu0
      %v1260 = vadd.f32 0.0, %v1259
      %v1261 = vpop.f32.mrb[0].mxu0
      %v1262 = vpop.f32.mrb[0].mxu0
      %v1263 = vadd.f32 0.0, %v1262
      %v1264 = vpop.f32.mrb[0].mxu0
      %1265 = vmatprep.mubr.bf16.mxu0 0
      %1266 = vmatmul.mubr.bf16.gmra.mrb[0].mxu0 %v529
      %v1267 = vpop.f32.mrb[0].mxu0
      %v1268 = vadd.f32 0.0, %v1267
      %v1269 = vpop.f32.mrb[0].mxu0
      %v1270 = vpop.f32.mrb[0].mxu0
      %v1271 = vadd.f32 0.0, %v1270
      %v1272 = vpop.f32.mrb[0].mxu0
      %1273 = vmatprep.mubr.bf16.mxu0 0
      %1274 = vmatmul.mubr.bf16.gmra.mrb[0].mxu0 %v532
      %v1275 = vpop.f32.mrb[0].mxu0
      %v1276 = vadd.f32 0.0, %v1275
      %v1277 = vpop.f32.mrb[0].mxu0
      %v1278 = vpop.f32.mrb[0].mxu0
      %v1279 = vadd.f32 0.0, %v1278
      %v1280 = vpop.f32.mrb[0].mxu0
      %1281 = vmatprep.mubr.bf16.mxu0 0
      %1282 = vmatmul.mubr.bf16.gmra.mrb[0].mxu0 %v1188
      %v1283 = vpop.f32.mrb[0].mxu0
      %v1284 = vadd.f32 0.0, %v1283
      %v1285 = vpop.f32.mrb[0].mxu0
      %v1286 = vpop.f32.mrb[0].mxu0
      %v1287 = vadd.f32 0.0, %v1286
      %v1288 = vpop.f32.mrb[0].mxu0
      %1289 = vdwg.mxu0
      %v1290 = vadd.f32 %v1142, %v1228
      %v1291 = vadd.f32 %v1143, %v1231
      %v1292 = vadd.f32 %v1144, %v1236
      %v1293 = vadd.f32 %v1145, %v1239
      %v1294 = vadd.f32 %v1146, %v1244
      %v1295 = vadd.f32 %v1147, %v1247
      %v1296 = vadd.f32 %v1148, %v1252
      %v1297 = vadd.f32 %v1149, %v1255
      %v1298 = vadd.f32 %v1150, %v1260
      %v1299 = vadd.f32 %v1151, %v1263
      %v1300 = vadd.f32 %v1152, %v1268
      %v1301 = vadd.f32 %v1153, %v1271
      %v1302 = vadd.f32 %v1154, %v1276
      %v1303 = vadd.f32 %v1155, %v1279
      %v1304 = vadd.f32 %v1156, %v1284
      %v1305 = vadd.f32 %v1157, %v1287
      %v1307 = vrot.slane %v281, 5
      %v1308 = vrot.slane %v1307, 4
      %v1309 = vrot.slane %v282, 5
      %v1310 = vsel %vm809, %v1308, %v1309
      %v1311 = vrot.slane %v1309, 4
      %v1312 = vrot.slane %v283, 5
      %v1313 = vsel %vm809, %v1311, %v1312
      %s1314 = scalar_lea.vmem %s238, 10
      %v1315 = vld [vmem:[%s1314] sm:$0x3]
      %v1316 = vunpack.c.l.b16 %v1310
      %v1317 = vunpack.c.l.b16 %v1313
      %v1318 = vpack.c.b16 %v1317, %v1316
      %v1320 = vsel %vm509, %v1318, 0
      %v1323 = vsel %vm534, %v1315, 0
      %1325 = vmatprep.subr.bf16.mxu0 0
      %1326 = vmatpush1.bf16.msra.mxu0 %v1323
      %1327 = vmatprep.subr.bf16.mxu0 0
      %1328 = vmatpush1.bf16.msra.mxu0 0
      %1329 = vmatprep.subr.bf16.mxu0 0
      %1330 = vmatpush1.bf16.msra.mxu0 0
      %1331 = vmatprep.subr.bf16.mxu0 0
      %1332 = vmatpush1.bf16.msra.mxu0 0
      %1333 = vmatprep.subr.bf16.mxu0 0
      %1334 = vmatpush1.bf16.msra.mxu0 0
      %1335 = vmatprep.subr.bf16.mxu0 0
      %1336 = vmatpush1.bf16.msra.mxu0 0
      %1337 = vmatprep.subr.bf16.mxu0 0
      %1338 = vmatpush1.bf16.msra.mxu0 0
      %1339 = vmatprep.subr.bf16.mxu0 0
      %1340 = vmatpush1.bf16.msra.mxu0 0
      %1341 = vmatprep.subr.bf16.mxu0 0
      %1342 = vmatpush1.bf16.msra.mxu0 0
      %1343 = vmatprep.subr.bf16.mxu0 0
      %1344 = vmatpush1.bf16.msra.mxu0 0
      %1345 = vmatprep.subr.bf16.mxu0 0
      %1346 = vmatpush1.bf16.msra.mxu0 0
      %1347 = vmatprep.subr.bf16.mxu0 0
      %1348 = vmatpush1.bf16.msra.mxu0 0
      %1349 = vmatprep.subr.bf16.mxu0 0
      %1350 = vmatpush1.bf16.msra.mxu0 0
      %1351 = vmatprep.subr.bf16.mxu0 0
      %1352 = vmatpush1.bf16.msra.mxu0 0
      %1353 = vmatprep.subr.bf16.mxu0 0
      %1354 = vmatpush1.bf16.msra.mxu0 0
      %1355 = vmatprep.subr.bf16.mxu0 0
      %1356 = vmatpush1.bf16.msra.mxu0 0
      %1357 = vmatprep.mubr.bf16.mxu0 0
      %1358 = vmatmul.mubr.bf16.gmra.mrb[0].mxu0 %v896
      %v1359 = vpop.f32.mrb[0].mxu0
      %v1360 = vadd.f32 0.0, %v1359
      %v1361 = vpop.f32.mrb[0].mxu0
      %v1362 = vpop.f32.mrb[0].mxu0
      %v1363 = vadd.f32 0.0, %v1362
      %v1364 = vpop.f32.mrb[0].mxu0
      %1365 = vmatprep.mubr.bf16.mxu0 0
      %1366 = vmatmul.mubr.bf16.gmra.mrb[0].mxu0 %v899
      %v1367 = vpop.f32.mrb[0].mxu0
      %v1368 = vadd.f32 0.0, %v1367
      %v1369 = vpop.f32.mrb[0].mxu0
      %v1370 = vpop.f32.mrb[0].mxu0
      %v1371 = vadd.f32 0.0, %v1370
      %v1372 = vpop.f32.mrb[0].mxu0
      %1373 = vmatprep.mubr.bf16.mxu0 0
      %1374 = vmatmul.mubr.bf16.gmra.mrb[0].mxu0 %v902
      %v1375 = vpop.f32.mrb[0].mxu0
      %v1376 = vadd.f32 0.0, %v1375
      %v1377 = vpop.f32.mrb[0].mxu0
      %v1378 = vpop.f32.mrb[0].mxu0
      %v1379 = vadd.f32 0.0, %v1378
      %v1380 = vpop.f32.mrb[0].mxu0
      %1381 = vmatprep.mubr.bf16.mxu0 0
      %1382 = vmatmul.mubr.bf16.gmra.mrb[0].mxu0 %v905
      %v1383 = vpop.f32.mrb[0].mxu0
      %v1384 = vadd.f32 0.0, %v1383
      %v1385 = vpop.f32.mrb[0].mxu0
      %v1386 = vpop.f32.mrb[0].mxu0
      %v1387 = vadd.f32 0.0, %v1386
      %v1388 = vpop.f32.mrb[0].mxu0
      %1389 = vmatprep.mubr.bf16.mxu0 0
      %1390 = vmatmul.mubr.bf16.gmra.mrb[0].mxu0 %v908
      %v1391 = vpop.f32.mrb[0].mxu0
      %v1392 = vadd.f32 0.0, %v1391
      %v1393 = vpop.f32.mrb[0].mxu0
      %v1394 = vpop.f32.mrb[0].mxu0
      %v1395 = vadd.f32 0.0, %v1394
      %v1396 = vpop.f32.mrb[0].mxu0
      %1397 = vmatprep.mubr.bf16.mxu0 0
      %1398 = vmatmul.mubr.bf16.gmra.mrb[0].mxu0 %v911
      %v1399 = vpop.f32.mrb[0].mxu0
      %v1400 = vadd.f32 0.0, %v1399
      %v1401 = vpop.f32.mrb[0].mxu0
      %v1402 = vpop.f32.mrb[0].mxu0
      %v1403 = vadd.f32 0.0, %v1402
      %v1404 = vpop.f32.mrb[0].mxu0
      %1405 = vmatprep.mubr.bf16.mxu0 0
      %1406 = vmatmul.mubr.bf16.gmra.mrb[0].mxu0 %v914
      %v1407 = vpop.f32.mrb[0].mxu0
      %v1408 = vadd.f32 0.0, %v1407
      %v1409 = vpop.f32.mrb[0].mxu0
      %v1410 = vpop.f32.mrb[0].mxu0
      %v1411 = vadd.f32 0.0, %v1410
      %v1412 = vpop.f32.mrb[0].mxu0
      %1413 = vmatprep.mubr.bf16.mxu0 0
      %1414 = vmatmul.mubr.bf16.gmra.mrb[0].mxu0 %v1320
      %v1415 = vpop.f32.mrb[0].mxu0
      %v1416 = vadd.f32 0.0, %v1415
      %v1417 = vpop.f32.mrb[0].mxu0
      %v1418 = vpop.f32.mrb[0].mxu0
      %v1419 = vadd.f32 0.0, %v1418
      %v1420 = vpop.f32.mrb[0].mxu0
      %1421 = vdwg.mxu0
      %v1422 = vadd.f32 %v1290, %v1360
      %v1423 = vadd.f32 %v1291, %v1363
      %v1424 = vadd.f32 %v1292, %v1368
      %v1425 = vadd.f32 %v1293, %v1371
      %v1426 = vadd.f32 %v1294, %v1376
      %v1427 = vadd.f32 %v1295, %v1379
      %v1428 = vadd.f32 %v1296, %v1384
      %v1429 = vadd.f32 %v1297, %v1387
      %v1430 = vadd.f32 %v1298, %v1392
      %v1431 = vadd.f32 %v1299, %v1395
      %v1432 = vadd.f32 %v1300, %v1400
      %v1433 = vadd.f32 %v1301, %v1403
      %v1434 = vadd.f32 %v1302, %v1408
      %v1435 = vadd.f32 %v1303, %v1411
      %v1436 = vadd.f32 %v1304, %v1416
      %v1437 = vadd.f32 %v1305, %v1419
      %s1438 = scalar_lea.vmem %s238, 12
      %v1439 = vld [vmem:[%s1438] sm:$0x3]
      %v1442 = vunpack.c.l.b16 %v284
      %v1443 = vunpack.c.l.b16 %v285
      %v1444 = vpack.c.b16 %v1443, %v1442
      %v1446 = vsel %vm509, %v1444, 0
      %v1449 = vsel %vm534, %v1439, 0
      %1451 = vmatprep.subr.bf16.mxu0 0
      %1452 = vmatpush1.bf16.msra.mxu0 %v1449
      %1453 = vmatprep.subr.bf16.mxu0 0
      %1454 = vmatpush1.bf16.msra.mxu0 0
      %1455 = vmatprep.subr.bf16.mxu0 0
      %1456 = vmatpush1.bf16.msra.mxu0 0
      %1457 = vmatprep.subr.bf16.mxu0 0
      %1458 = vmatpush1.bf16.msra.mxu0 0
      %1459 = vmatprep.subr.bf16.mxu0 0
      %1460 = vmatpush1.bf16.msra.mxu0 0
      %1461 = vmatprep.subr.bf16.mxu0 0
      %1462 = vmatpush1.bf16.msra.mxu0 0
      %1463 = vmatprep.subr.bf16.mxu0 0
      %1464 = vmatpush1.bf16.msra.mxu0 0
      %1465 = vmatprep.subr.bf16.mxu0 0
      %1466 = vmatpush1.bf16.msra.mxu0 0
      %1467 = vmatprep.subr.bf16.mxu0 0
      %1468 = vmatpush1.bf16.msra.mxu0 0
      %1469 = vmatprep.subr.bf16.mxu0 0
      %1470 = vmatpush1.bf16.msra.mxu0 0
      %1471 = vmatprep.subr.bf16.mxu0 0
      %1472 = vmatpush1.bf16.msra.mxu0 0
      %1473 = vmatprep.subr.bf16.mxu0 0
      %1474 = vmatpush1.bf16.msra.mxu0 0
      %1475 = vmatprep.subr.bf16.mxu0 0
      %1476 = vmatpush1.bf16.msra.mxu0 0
      %1477 = vmatprep.subr.bf16.mxu0 0
      %1478 = vmatpush1.bf16.msra.mxu0 0
      %1479 = vmatprep.subr.bf16.mxu0 0
      %1480 = vmatpush1.bf16.msra.mxu0 0
      %1481 = vmatprep.subr.bf16.mxu0 0
      %1482 = vmatpush1.bf16.msra.mxu0 0
      %1483 = vmatprep.mubr.bf16.mxu0 0
      %1484 = vmatmul.mubr.bf16.gmra.mrb[0].mxu0 %v682
      %v1485 = vpop.f32.mrb[0].mxu0
      %v1486 = vadd.f32 0.0, %v1485
      %v1487 = vpop.f32.mrb[0].mxu0
      %v1488 = vpop.f32.mrb[0].mxu0
      %v1489 = vadd.f32 0.0, %v1488
      %v1490 = vpop.f32.mrb[0].mxu0
      %1491 = vmatprep.mubr.bf16.mxu0 0
      %1492 = vmatmul.mubr.bf16.gmra.mrb[0].mxu0 %v685
      %v1493 = vpop.f32.mrb[0].mxu0
      %v1494 = vadd.f32 0.0, %v1493
      %v1495 = vpop.f32.mrb[0].mxu0
      %v1496 = vpop.f32.mrb[0].mxu0
      %v1497 = vadd.f32 0.0, %v1496
      %v1498 = vpop.f32.mrb[0].mxu0
      %1499 = vmatprep.mubr.bf16.mxu0 0
      %1500 = vmatmul.mubr.bf16.gmra.mrb[0].mxu0 %v688
      %v1501 = vpop.f32.mrb[0].mxu0
      %v1502 = vadd.f32 0.0, %v1501
      %v1503 = vpop.f32.mrb[0].mxu0
      %v1504 = vpop.f32.mrb[0].mxu0
      %v1505 = vadd.f32 0.0, %v1504
      %v1506 = vpop.f32.mrb[0].mxu0
      %1507 = vmatprep.mubr.bf16.mxu0 0
      %1508 = vmatmul.mubr.bf16.gmra.mrb[0].mxu0 %v691
      %v1509 = vpop.f32.mrb[0].mxu0
      %v1510 = vadd.f32 0.0, %v1509
      %v1511 = vpop.f32.mrb[0].mxu0
      %v1512 = vpop.f32.mrb[0].mxu0
      %v1513 = vadd.f32 0.0, %v1512
      %v1514 = vpop.f32.mrb[0].mxu0
      %1515 = vmatprep.mubr.bf16.mxu0 0
      %1516 = vmatmul.mubr.bf16.gmra.mrb[0].mxu0 %v694
      %v1517 = vpop.f32.mrb[0].mxu0
      %v1518 = vadd.f32 0.0, %v1517
      %v1519 = vpop.f32.mrb[0].mxu0
      %v1520 = vpop.f32.mrb[0].mxu0
      %v1521 = vadd.f32 0.0, %v1520
      %v1522 = vpop.f32.mrb[0].mxu0
      %1523 = vmatprep.mubr.bf16.mxu0 0
      %1524 = vmatmul.mubr.bf16.gmra.mrb[0].mxu0 %v697
      %v1525 = vpop.f32.mrb[0].mxu0
      %v1526 = vadd.f32 0.0, %v1525
      %v1527 = vpop.f32.mrb[0].mxu0
      %v1528 = vpop.f32.mrb[0].mxu0
      %v1529 = vadd.f32 0.0, %v1528
      %v1530 = vpop.f32.mrb[0].mxu0
      %1531 = vmatprep.mubr.bf16.mxu0 0
      %1532 = vmatmul.mubr.bf16.gmra.mrb[0].mxu0 %v1040
      %v1533 = vpop.f32.mrb[0].mxu0
      %v1534 = vadd.f32 0.0, %v1533
      %v1535 = vpop.f32.mrb[0].mxu0
      %v1536 = vpop.f32.mrb[0].mxu0
      %v1537 = vadd.f32 0.0, %v1536
      %v1538 = vpop.f32.mrb[0].mxu0
      %1539 = vmatprep.mubr.bf16.mxu0 0
      %1540 = vmatmul.mubr.bf16.gmra.mrb[0].mxu0 %v1446
      %v1541 = vpop.f32.mrb[0].mxu0
      %v1542 = vadd.f32 0.0, %v1541
      %v1543 = vpop.f32.mrb[0].mxu0
      %v1544 = vpop.f32.mrb[0].mxu0
      %v1545 = vadd.f32 0.0, %v1544
      %v1546 = vpop.f32.mrb[0].mxu0
      %1547 = vdwg.mxu0
      %v1548 = vadd.f32 %v1422, %v1486
      %v1549 = vadd.f32 %v1423, %v1489
      %v1550 = vadd.f32 %v1424, %v1494
      %v1551 = vadd.f32 %v1425, %v1497
      %v1552 = vadd.f32 %v1426, %v1502
      %v1553 = vadd.f32 %v1427, %v1505
      %v1554 = vadd.f32 %v1428, %v1510
      %v1555 = vadd.f32 %v1429, %v1513
      %v1556 = vadd.f32 %v1430, %v1518
      %v1557 = vadd.f32 %v1431, %v1521
      %v1558 = vadd.f32 %v1432, %v1526
      %v1559 = vadd.f32 %v1433, %v1529
      %v1560 = vadd.f32 %v1434, %v1534
      %v1561 = vadd.f32 %v1435, %v1537
      %v1562 = vadd.f32 %v1436, %v1542
      %v1563 = vadd.f32 %v1437, %v1545
      %v1565 = vshrl.u32 %v284, 16
      %v1567 = vrot.slane %v1565, 4
      %v1568 = vshll.u32 %v284, 16
      %v1570 = vrot.slane %v1568, 5
      %v1571 = vor.u32 %v1567, %v1570
      %v1572 = vrot.slane %v1571, 4
      %v1574 = vshll.u32 %v285, 16
      %v1576 = vrot.slane %v1574, 5
      %v1577 = vsel %vm290, %v1572, %v1576
      %v1578 = vshrl.u32 %v285, 16
      %v1580 = vrot.slane %v1578, 4
      %v1581 = vor.u32 %v1580, %v1576
      %v1582 = vrot.slane %v1581, 4
      %v1584 = vshll.u32 %v286, 16
      %v1586 = vrot.slane %v1584, 5
      %v1587 = vsel %vm290, %v1582, %v1586
      %s1588 = scalar_lea.vmem %s238, 14
      %v1589 = vld [vmem:[%s1588] sm:$0x3]
      %v1590 = vunpack.c.l.b16 %v1577
      %v1591 = vunpack.c.l.b16 %v1587
      %v1592 = vpack.c.b16 %v1591, %v1590
      %v1594 = vsel %vm509, %v1592, 0
      %v1597 = vsel %vm534, %v1589, 0
      %1599 = vmatprep.subr.bf16.mxu0 0
      %1600 = vmatpush1.bf16.msra.mxu0 %v1597
      %1601 = vmatprep.subr.bf16.mxu0 0
      %1602 = vmatpush1.bf16.msra.mxu0 0
      %1603 = vmatprep.subr.bf16.mxu0 0
      %1604 = vmatpush1.bf16.msra.mxu0 0
      %1605 = vmatprep.subr.bf16.mxu0 0
      %1606 = vmatpush1.bf16.msra.mxu0 0
      %1607 = vmatprep.subr.bf16.mxu0 0
      %1608 = vmatpush1.bf16.msra.mxu0 0
      %1609 = vmatprep.subr.bf16.mxu0 0
      %1610 = vmatpush1.bf16.msra.mxu0 0
      %1611 = vmatprep.subr.bf16.mxu0 0
      %1612 = vmatpush1.bf16.msra.mxu0 0
      %1613 = vmatprep.subr.bf16.mxu0 0
      %1614 = vmatpush1.bf16.msra.mxu0 0
      %1615 = vmatprep.subr.bf16.mxu0 0
      %1616 = vmatpush1.bf16.msra.mxu0 0
      %1617 = vmatprep.subr.bf16.mxu0 0
      %1618 = vmatpush1.bf16.msra.mxu0 0
      %1619 = vmatprep.subr.bf16.mxu0 0
      %1620 = vmatpush1.bf16.msra.mxu0 0
      %1621 = vmatprep.subr.bf16.mxu0 0
      %1622 = vmatpush1.bf16.msra.mxu0 0
      %1623 = vmatprep.subr.bf16.mxu0 0
      %1624 = vmatpush1.bf16.msra.mxu0 0
      %1625 = vmatprep.subr.bf16.mxu0 0
      %1626 = vmatpush1.bf16.msra.mxu0 0
      %1627 = vmatprep.subr.bf16.mxu0 0
      %1628 = vmatpush1.bf16.msra.mxu0 0
      %1629 = vmatprep.subr.bf16.mxu0 0
      %1630 = vmatpush1.bf16.msra.mxu0 0
      %1631 = vmatprep.mubr.bf16.mxu0 0
      %1632 = vmatmul.mubr.bf16.gmra.mrb[0].mxu0 %v517
      %v1633 = vpop.f32.mrb[0].mxu0
      %v1634 = vadd.f32 0.0, %v1633
      %v1635 = vpop.f32.mrb[0].mxu0
      %v1636 = vpop.f32.mrb[0].mxu0
      %v1637 = vadd.f32 0.0, %v1636
      %v1638 = vpop.f32.mrb[0].mxu0
      %1639 = vmatprep.mubr.bf16.mxu0 0
      %1640 = vmatmul.mubr.bf16.gmra.mrb[0].mxu0 %v520
      %v1641 = vpop.f32.mrb[0].mxu0
      %v1642 = vadd.f32 0.0, %v1641
      %v1643 = vpop.f32.mrb[0].mxu0
      %v1644 = vpop.f32.mrb[0].mxu0
      %v1645 = vadd.f32 0.0, %v1644
      %v1646 = vpop.f32.mrb[0].mxu0
      %1647 = vmatprep.mubr.bf16.mxu0 0
      %1648 = vmatmul.mubr.bf16.gmra.mrb[0].mxu0 %v523
      %v1649 = vpop.f32.mrb[0].mxu0
      %v1650 = vadd.f32 0.0, %v1649
      %v1651 = vpop.f32.mrb[0].mxu0
      %v1652 = vpop.f32.mrb[0].mxu0
      %v1653 = vadd.f32 0.0, %v1652
      %v1654 = vpop.f32.mrb[0].mxu0
      %1655 = vmatprep.mubr.bf16.mxu0 0
      %1656 = vmatmul.mubr.bf16.gmra.mrb[0].mxu0 %v526
      %v1657 = vpop.f32.mrb[0].mxu0
      %v1658 = vadd.f32 0.0, %v1657
      %v1659 = vpop.f32.mrb[0].mxu0
      %v1660 = vpop.f32.mrb[0].mxu0
      %v1661 = vadd.f32 0.0, %v1660
      %v1662 = vpop.f32.mrb[0].mxu0
      %1663 = vmatprep.mubr.bf16.mxu0 0
      %1664 = vmatmul.mubr.bf16.gmra.mrb[0].mxu0 %v529
      %v1665 = vpop.f32.mrb[0].mxu0
      %v1666 = vadd.f32 0.0, %v1665
      %v1667 = vpop.f32.mrb[0].mxu0
      %v1668 = vpop.f32.mrb[0].mxu0
      %v1669 = vadd.f32 0.0, %v1668
      %v1670 = vpop.f32.mrb[0].mxu0
      %1671 = vmatprep.mubr.bf16.mxu0 0
      %1672 = vmatmul.mubr.bf16.gmra.mrb[0].mxu0 %v532
      %v1673 = vpop.f32.mrb[0].mxu0
      %v1674 = vadd.f32 0.0, %v1673
      %v1675 = vpop.f32.mrb[0].mxu0
      %v1676 = vpop.f32.mrb[0].mxu0
      %v1677 = vadd.f32 0.0, %v1676
      %v1678 = vpop.f32.mrb[0].mxu0
      %1679 = vmatprep.mubr.bf16.mxu0 0
      %1680 = vmatmul.mubr.bf16.gmra.mrb[0].mxu0 %v1188
      %v1681 = vpop.f32.mrb[0].mxu0
      %v1682 = vadd.f32 0.0, %v1681
      %v1683 = vpop.f32.mrb[0].mxu0
      %v1684 = vpop.f32.mrb[0].mxu0
      %v1685 = vadd.f32 0.0, %v1684
      %v1686 = vpop.f32.mrb[0].mxu0
      %1687 = vmatprep.mubr.bf16.mxu0 0
      %1688 = vmatmul.mubr.bf16.gmra.mrb[0].mxu0 %v1594
      %v1689 = vpop.f32.mrb[0].mxu0
      %v1690 = vadd.f32 0.0, %v1689
      %v1691 = vpop.f32.mrb[0].mxu0
      %v1692 = vpop.f32.mrb[0].mxu0
      %v1693 = vadd.f32 0.0, %v1692
      %v1694 = vpop.f32.mrb[0].mxu0
      %1695 = vdwg.mxu0
      %v1696 = vadd.f32 %v1548, %v1634
      %v1697 = vadd.f32 %v1549, %v1637
      %v1698 = vadd.f32 %v1550, %v1642
      %v1699 = vadd.f32 %v1551, %v1645
      %v1700 = vadd.f32 %v1552, %v1650
      %v1701 = vadd.f32 %v1553, %v1653
      %v1702 = vadd.f32 %v1554, %v1658
      %v1703 = vadd.f32 %v1555, %v1661
      %v1704 = vadd.f32 %v1556, %v1666
      %v1705 = vadd.f32 %v1557, %v1669
      %v1706 = vadd.f32 %v1558, %v1674
      %v1707 = vadd.f32 %v1559, %v1677
      %v1708 = vadd.f32 %v1560, %v1682
      %v1709 = vadd.f32 %v1561, %v1685
      %v1710 = vadd.f32 %v1562, %v1690
      %v1711 = vadd.f32 %v1563, %v1693
      %v1713 = vrot.slane %v284, 5
      %v1714 = vrot.slane %v1713, 4
      %v1715 = vrot.slane %v285, 5
      %v1716 = vsel %vm809, %v1714, %v1715
      %v1717 = vrot.slane %v1715, 4
      %v1718 = vrot.slane %v286, 5
      %v1719 = vsel %vm809, %v1717, %v1718
      %s1720 = scalar_lea.vmem %s238, 16
      %v1721 = vld [vmem:[%s1720] sm:$0x3]
      %v1722 = vunpack.c.l.b16 %v1716
      %v1723 = vunpack.c.l.b16 %v1719
      %v1724 = vpack.c.b16 %v1723, %v1722
      %v1726 = vsel %vm509, %v1724, 0
      %v1729 = vsel %vm534, %v1721, 0
      %1731 = vmatprep.subr.bf16.mxu0 0
      %1732 = vmatpush1.bf16.msra.mxu0 %v1729
      %1733 = vmatprep.subr.bf16.mxu0 0
      %1734 = vmatpush1.bf16.msra.mxu0 0
      %1735 = vmatprep.subr.bf16.mxu0 0
      %1736 = vmatpush1.bf16.msra.mxu0 0
      %1737 = vmatprep.subr.bf16.mxu0 0
      %1738 = vmatpush1.bf16.msra.mxu0 0
      %1739 = vmatprep.subr.bf16.mxu0 0
      %1740 = vmatpush1.bf16.msra.mxu0 0
      %1741 = vmatprep.subr.bf16.mxu0 0
      %1742 = vmatpush1.bf16.msra.mxu0 0
      %1743 = vmatprep.subr.bf16.mxu0 0
      %1744 = vmatpush1.bf16.msra.mxu0 0
      %1745 = vmatprep.subr.bf16.mxu0 0
      %1746 = vmatpush1.bf16.msra.mxu0 0
      %1747 = vmatprep.subr.bf16.mxu0 0
      %1748 = vmatpush1.bf16.msra.mxu0 0
      %1749 = vmatprep.subr.bf16.mxu0 0
      %1750 = vmatpush1.bf16.msra.mxu0 0
      %1751 = vmatprep.subr.bf16.mxu0 0
      %1752 = vmatpush1.bf16.msra.mxu0 0
      %1753 = vmatprep.subr.bf16.mxu0 0
      %1754 = vmatpush1.bf16.msra.mxu0 0
      %1755 = vmatprep.subr.bf16.mxu0 0
      %1756 = vmatpush1.bf16.msra.mxu0 0
      %1757 = vmatprep.subr.bf16.mxu0 0
      %1758 = vmatpush1.bf16.msra.mxu0 0
      %1759 = vmatprep.subr.bf16.mxu0 0
      %1760 = vmatpush1.bf16.msra.mxu0 0
      %1761 = vmatprep.subr.bf16.mxu0 0
      %1762 = vmatpush1.bf16.msra.mxu0 0
      %1763 = vmatprep.mubr.bf16.mxu0 0
      %1764 = vmatmul.mubr.bf16.gmra.mrb[0].mxu0 %v899
      %v1765 = vpop.f32.mrb[0].mxu0
      %v1766 = vadd.f32 0.0, %v1765
      %v1767 = vpop.f32.mrb[0].mxu0
      %v1768 = vpop.f32.mrb[0].mxu0
      %v1769 = vadd.f32 0.0, %v1768
      %v1770 = vpop.f32.mrb[0].mxu0
      %1771 = vmatprep.mubr.bf16.mxu0 0
      %1772 = vmatmul.mubr.bf16.gmra.mrb[0].mxu0 %v902
      %v1773 = vpop.f32.mrb[0].mxu0
      %v1774 = vadd.f32 0.0, %v1773
      %v1775 = vpop.f32.mrb[0].mxu0
      %v1776 = vpop.f32.mrb[0].mxu0
      %v1777 = vadd.f32 0.0, %v1776
      %v1778 = vpop.f32.mrb[0].mxu0
      %1779 = vmatprep.mubr.bf16.mxu0 0
      %1780 = vmatmul.mubr.bf16.gmra.mrb[0].mxu0 %v905
      %v1781 = vpop.f32.mrb[0].mxu0
      %v1782 = vadd.f32 0.0, %v1781
      %v1783 = vpop.f32.mrb[0].mxu0
      %v1784 = vpop.f32.mrb[0].mxu0
      %v1785 = vadd.f32 0.0, %v1784
      %v1786 = vpop.f32.mrb[0].mxu0
      %1787 = vmatprep.mubr.bf16.mxu0 0
      %1788 = vmatmul.mubr.bf16.gmra.mrb[0].mxu0 %v908
      %v1789 = vpop.f32.mrb[0].mxu0
      %v1790 = vadd.f32 0.0, %v1789
      %v1791 = vpop.f32.mrb[0].mxu0
      %v1792 = vpop.f32.mrb[0].mxu0
      %v1793 = vadd.f32 0.0, %v1792
      %v1794 = vpop.f32.mrb[0].mxu0
      %1795 = vmatprep.mubr.bf16.mxu0 0
      %1796 = vmatmul.mubr.bf16.gmra.mrb[0].mxu0 %v911
      %v1797 = vpop.f32.mrb[0].mxu0
      %v1798 = vadd.f32 0.0, %v1797
      %v1799 = vpop.f32.mrb[0].mxu0
      %v1800 = vpop.f32.mrb[0].mxu0
      %v1801 = vadd.f32 0.0, %v1800
      %v1802 = vpop.f32.mrb[0].mxu0
      %1803 = vmatprep.mubr.bf16.mxu0 0
      %1804 = vmatmul.mubr.bf16.gmra.mrb[0].mxu0 %v914
      %v1805 = vpop.f32.mrb[0].mxu0
      %v1806 = vadd.f32 0.0, %v1805
      %v1807 = vpop.f32.mrb[0].mxu0
      %v1808 = vpop.f32.mrb[0].mxu0
      %v1809 = vadd.f32 0.0, %v1808
      %v1810 = vpop.f32.mrb[0].mxu0
      %1811 = vmatprep.mubr.bf16.mxu0 0
      %1812 = vmatmul.mubr.bf16.gmra.mrb[0].mxu0 %v1320
      %v1813 = vpop.f32.mrb[0].mxu0
      %v1814 = vadd.f32 0.0, %v1813
      %v1815 = vpop.f32.mrb[0].mxu0
      %v1816 = vpop.f32.mrb[0].mxu0
      %v1817 = vadd.f32 0.0, %v1816
      %v1818 = vpop.f32.mrb[0].mxu0
      %1819 = vmatprep.mubr.bf16.mxu0 0
      %1820 = vmatmul.mubr.bf16.gmra.mrb[0].mxu0 %v1726
      %v1821 = vpop.f32.mrb[0].mxu0
      %v1822 = vadd.f32 0.0, %v1821
      %v1823 = vpop.f32.mrb[0].mxu0
      %v1824 = vpop.f32.mrb[0].mxu0
      %v1825 = vadd.f32 0.0, %v1824
      %v1826 = vpop.f32.mrb[0].mxu0
      %1827 = vdwg.mxu0
      %v1828 = vadd.f32 %v1696, %v1766
      %v1829 = vadd.f32 %v1697, %v1769
      %v1830 = vadd.f32 %v1698, %v1774
      %v1831 = vadd.f32 %v1699, %v1777
      %v1832 = vadd.f32 %v1700, %v1782
      %v1833 = vadd.f32 %v1701, %v1785
      %v1834 = vadd.f32 %v1702, %v1790
      %v1835 = vadd.f32 %v1703, %v1793
      %v1836 = vadd.f32 %v1704, %v1798
      %v1837 = vadd.f32 %v1705, %v1801
      %v1838 = vadd.f32 %v1706, %v1806
      %v1839 = vadd.f32 %v1707, %v1809
      %v1840 = vadd.f32 %v1708, %v1814
      %v1841 = vadd.f32 %v1709, %v1817
      %v1842 = vadd.f32 %v1710, %v1822
      %v1843 = vadd.f32 %v1711, %v1825
      %v1844 = vld [vmem:[%s241] sm:$0x1]
      %v1846 = vlaneseq
      %v1847 = vshrl.u32 %v1846, 7
      %v1848 = vsub.s32 0, %v1847
      %v1849 = vrot.slane %v1844, %v1848
      %v1851 = vadd.f32 %v1828, %v1849
      %v1852 = vadd.f32 %v1829, %v1849
      %v1853 = vadd.f32 %v1830, %v1849
      %v1854 = vadd.f32 %v1831, %v1849
      %v1855 = vadd.f32 %v1832, %v1849
      %v1856 = vadd.f32 %v1833, %v1849
      %v1857 = vadd.f32 %v1834, %v1849
      %v1858 = vadd.f32 %v1835, %v1849
      %v1859 = vadd.f32 %v1836, %v1849
      %v1860 = vadd.f32 %v1837, %v1849
      %v1861 = vadd.f32 %v1838, %v1849
      %v1862 = vadd.f32 %v1839, %v1849
      %v1863 = vadd.f32 %v1840, %v1849
      %v1864 = vadd.f32 %v1841, %v1849
      %v1865 = vadd.f32 %v1842, %v1849
      %v1866 = vadd.f32 %v1843, %v1849
      %v1867 = vxor.u32 %v1851, 2147483648
      %v1868 = vxor.u32 %v1852, 2147483648
      %v1869 = vxor.u32 %v1853, 2147483648
      %v1870 = vxor.u32 %v1854, 2147483648
      %v1871 = vxor.u32 %v1855, 2147483648
      %v1872 = vxor.u32 %v1856, 2147483648
      %v1873 = vxor.u32 %v1857, 2147483648
      %v1874 = vxor.u32 %v1858, 2147483648
      %v1875 = vxor.u32 %v1859, 2147483648
      %v1876 = vxor.u32 %v1860, 2147483648
      %v1877 = vxor.u32 %v1861, 2147483648
      %v1878 = vxor.u32 %v1862, 2147483648
      %v1879 = vxor.u32 %v1863, 2147483648
      %v1880 = vxor.u32 %v1864, 2147483648
      %v1881 = vxor.u32 %v1865, 2147483648
      %v1882 = vxor.u32 %v1866, 2147483648
      %v1883 = vmul.f32 %v1867, 1.442695
      %v1884 = vpow.pop %v1883
      %v1885 = vmul.f32 %v1868, 1.442695
      %v1886 = vpow.pop %v1885
      %v1887 = vmul.f32 %v1869, 1.442695
      %v1888 = vpow.pop %v1887
      %v1889 = vmul.f32 %v1870, 1.442695
      %v1890 = vpow.pop %v1889
      %v1891 = vmul.f32 %v1871, 1.442695
      %v1892 = vpow.pop %v1891
      %v1893 = vmul.f32 %v1872, 1.442695
      %v1894 = vpow.pop %v1893
      %v1895 = vmul.f32 %v1873, 1.442695
      %v1896 = vpow.pop %v1895
      %v1897 = vmul.f32 %v1874, 1.442695
      %v1898 = vpow.pop %v1897
      %v1899 = vmul.f32 %v1875, 1.442695
      %v1900 = vpow.pop %v1899
      %v1901 = vmul.f32 %v1876, 1.442695
      %v1902 = vpow.pop %v1901
      %v1903 = vmul.f32 %v1877, 1.442695
      %v1904 = vpow.pop %v1903
      %v1905 = vmul.f32 %v1878, 1.442695
      %v1906 = vpow.pop %v1905
      %v1907 = vmul.f32 %v1879, 1.442695
      %v1908 = vpow.pop %v1907
      %v1909 = vmul.f32 %v1880, 1.442695
      %v1910 = vpow.pop %v1909
      %v1911 = vmul.f32 %v1881, 1.442695
      %v1912 = vpow.pop %v1911
      %v1913 = vmul.f32 %v1882, 1.442695
      %v1914 = vpow.pop %v1913
      %v1915 = vadd.f32 %v1884, 1.0
      %v1916 = vadd.f32 %v1886, 1.0
      %v1917 = vadd.f32 %v1888, 1.0
      %v1918 = vadd.f32 %v1890, 1.0
      %v1919 = vadd.f32 %v1892, 1.0
      %v1920 = vadd.f32 %v1894, 1.0
      %v1921 = vadd.f32 %v1896, 1.0
      %v1922 = vadd.f32 %v1898, 1.0
      %v1923 = vadd.f32 %v1900, 1.0
      %v1924 = vadd.f32 %v1902, 1.0
      %v1925 = vadd.f32 %v1904, 1.0
      %v1926 = vadd.f32 %v1906, 1.0
      %v1927 = vadd.f32 %v1908, 1.0
      %v1928 = vadd.f32 %v1910, 1.0
      %v1929 = vadd.f32 %v1912, 1.0
      %v1930 = vadd.f32 %v1914, 1.0
      %v1931 = vrcp.pop %v1915
      %v1932 = vmul.f32 1.0, %v1931
      %v1933 = vrcp.pop %v1916
      %v1934 = vmul.f32 1.0, %v1933
      %v1935 = vrcp.pop %v1917
      %v1936 = vmul.f32 1.0, %v1935
      %v1937 = vrcp.pop %v1918
      %v1938 = vmul.f32 1.0, %v1937
      %v1939 = vrcp.pop %v1919
      %v1940 = vmul.f32 1.0, %v1939
      %v1941 = vrcp.pop %v1920
      %v1942 = vmul.f32 1.0, %v1941
      %v1943 = vrcp.pop %v1921
      %v1944 = vmul.f32 1.0, %v1943
      %v1945 = vrcp.pop %v1922
      %v1946 = vmul.f32 1.0, %v1945
      %v1947 = vrcp.pop %v1923
      %v1948 = vmul.f32 1.0, %v1947
      %v1949 = vrcp.pop %v1924
      %v1950 = vmul.f32 1.0, %v1949
      %v1951 = vrcp.pop %v1925
      %v1952 = vmul.f32 1.0, %v1951
      %v1953 = vrcp.pop %v1926
      %v1954 = vmul.f32 1.0, %v1953
      %v1955 = vrcp.pop %v1927
      %v1956 = vmul.f32 1.0, %v1955
      %v1957 = vrcp.pop %v1928
      %v1958 = vmul.f32 1.0, %v1957
      %v1959 = vrcp.pop %v1929
      %v1960 = vmul.f32 1.0, %v1959
      %v1961 = vrcp.pop %v1930
      %v1962 = vmul.f32 1.0, %v1961
      %v1963 = vmul.f32 %v1851, %v1932
      %v1964 = vmul.f32 %v1852, %v1934
      %v1965 = vmul.f32 %v1853, %v1936
      %v1966 = vmul.f32 %v1854, %v1938
      %v1967 = vmul.f32 %v1855, %v1940
      %v1968 = vmul.f32 %v1856, %v1942
      %v1969 = vmul.f32 %v1857, %v1944
      %v1970 = vmul.f32 %v1858, %v1946
      %v1971 = vmul.f32 %v1859, %v1948
      %v1972 = vmul.f32 %v1860, %v1950
      %v1973 = vmul.f32 %v1861, %v1952
      %v1974 = vmul.f32 %v1862, %v1954
      %v1975 = vmul.f32 %v1863, %v1956
      %v1976 = vmul.f32 %v1864, %v1958
      %v1977 = vmul.f32 %v1865, %v1960
      %v1978 = vmul.f32 %v1866, %v1962
      %1979 = vst [vmem:[%s254] sm:$0xff] %v1963
      %1980 = vst [vmem:[%s254 + $0x8] sm:$0xff] %v1964
      %1981 = vst [vmem:[%s254 + $0x10] sm:$0xff] %v1965
      %1982 = vst [vmem:[%s254 + $0x18] sm:$0xff] %v1966
      %1983 = vst [vmem:[%s254 + $0x20] sm:$0xff] %v1967
      %1984 = vst [vmem:[%s254 + $0x28] sm:$0xff] %v1968
      %1985 = vst [vmem:[%s254 + $0x30] sm:$0xff] %v1969
      %1986 = vst [vmem:[%s254 + $0x38] sm:$0xff] %v1970
      %1987 = vst [vmem:[%s254 + $0x40] sm:$0xff] %v1971
      %1988 = vst [vmem:[%s254 + $0x48] sm:$0xff] %v1972
      %1989 = vst [vmem:[%s254 + $0x50] sm:$0xff] %v1973
      %1990 = vst [vmem:[%s254 + $0x58] sm:$0xff] %v1974
      %1991 = vst [vmem:[%s254 + $0x60] sm:$0xff] %v1975
      %1992 = vst [vmem:[%s254 + $0x68] sm:$0xff] %v1976
      %1993 = vst [vmem:[%s254 + $0x70] sm:$0xff] %v1977
      %1994 = vst [vmem:[%s254 + $0x78] sm:$0xff] %v1978
      %s1995 = smul.u32 8, %s20
      %p1996 = scmp.lt.s32.totalorder %s19, 1
      %s1997 = scalar_select %p1996, %s19, 1
      %p1998 = scmp.lt.s32.totalorder %s1995, 15
      %s1999 = scalar_select %p1998, %s1995, 15
      %p2000 = scmp.lt.s32.totalorder %s21, 0
      %s2001 = scalar_select %p2000, %s21, 0
      %s2002 = smul.addr %s1999, 2
      %s2003 = sadd.s32 %s2001, %s2002
      %s2004 = smul.addr %s1997, 32
      %s2005 = sadd.s32 %s2003, %s2004
      %s2006 = smul.addr %s2005, 8
      %s2007 = scalar_lea.vmem %s3, %s2006
      // Predicated region
      $region33: #{cnn_block_forward.1} parent=31 // pred_check
        %p2008 = pneg %p135
      $region34: #{cnn_block_forward.1} parent=31 // pred_check_branch
        %2010 = sbr.rel (%p2008) target = $region36
      $region35: #{cnn_block_forward.1} parent=31 // pred_region
        %s2011 = smul.u32 8, %s20
      $region36: #{cnn_block_forward.1} parent=31 // pred_fallthru
        _
    $region32: #{cnn_block_forward.1} parent=5 // pred_fallthru
      _
    %p2012 = scmp.le.s32.totalorder 2, %s9
    // Predicated region
    $region37: #{cnn_block_forward.1} parent=5 // pred_check
      %p2013 = pneg %p2012
    $region38: #{cnn_block_forward.1} parent=5 // pred_check_branch
      %2015 = sbr.rel (%p2013) target = $region40
    $region39: #{cnn_block_forward.1} parent=5 // pred_region
      %s2016 = ssub.s32 %s9, 2
      // Predicated region
      $region41: #{cnn_block_forward.1} parent=39 // pred_check
        %p2017 = pneg %p141
      $region42: #{cnn_block_forward.1} parent=39 // pred_check_branch
        %2019 = sbr.rel (%p2017) target = $region44
      $region43: #{cnn_block_forward.1} parent=39 // pred_region
        %s2020 = smul.u32 8, %s23
        %p2021 = scmp.lt.s32.totalorder %s22, 1
        %s2022 = scalar_select %p2021, %s22, 1
        %p2023 = scmp.lt.s32.totalorder %s2020, 15
        %s2024 = scalar_select %p2023, %s2020, 15
        %p2025 = scmp.lt.s32.totalorder %s24, 0
        %s2026 = scalar_select %p2025, %s24, 0
        %s2027 = smul.addr %s2024, 2
        %s2028 = sadd.s32 %s2026, %s2027
        %s2029 = smul.addr %s2022, 32
        %s2030 = sadd.s32 %s2028, %s2029
        %s2031 = smul.addr %s2030, 8
        %s2032 = scalar_lea.vmem %s3, %s2031
      $region44: #{cnn_block_forward.1} parent=39 // pred_fallthru
        _
    $region40: #{cnn_block_forward.1} parent=5 // pred_fallthru
      _
  $region6: #{cnn_block_forward.1} parent=0 // loop_footer
    %s13 = sadd.s32 1, %s9
  $region7: #{cnn_block_forward.1} parent=0 // loop_footer_branch
    %8 = sbr.rel target = $region3
  $region8: #{cnn_block_forward.1} parent=0 // loop_exit
    _

</llo_original>
